<compile_context>
chip_gen: v6e
topology: v6e:2x2x1
jax: 0.10.0
libtpu: 0.0.40
codegen_flags: <defaults>
</compile_context>

<pallas_src>
import jax
import jax.numpy as jnp
from jax.experimental import pallas as pl
from jax.experimental.pallas import tpu as pltpu


def _wsconv_leaky_kernel(scale, negative_slope):
    """3x3 conv (as 3 shifted matmuls) + bias + LeakyReLU on one (TH, W) row tile."""

    def kernel(x_ref, w_ref, b_ref, o_ref):
        # x_ref: (1, TH, W+2, 3*Cin)  row-expanded, spatially padded input tile
        # w_ref: (3, 3*Cin, TCo)      weights regrouped per horizontal tap dx
        # b_ref: (1, TCo)
        # o_ref: (1, TH, W, TCo)
        _, th, _wp, c3 = x_ref.shape
        _, _, w_out, co = o_ref.shape

        acc = jnp.zeros((th * w_out, co), dtype=jnp.float32)
        for dx in range(3):
            # output column w uses padded input column (w + dx)
            patch = x_ref[0, :, dx:dx + w_out, :].astype(jnp.float32) * scale
            patch = patch.reshape(th * w_out, c3)
            acc = acc + jnp.dot(patch, w_ref[dx].astype(jnp.float32),
                                preferred_element_type=jnp.float32)

        acc = acc + b_ref[...].astype(jnp.float32)             # (1, TCo) broadcast
        acc = jnp.where(acc >= 0, acc, negative_slope * acc)   # LeakyReLU(0.2)
        o_ref[...] = acc.reshape(1, th, w_out, co).astype(o_ref.dtype)

    return kernel


def _pick_cout_tile(cout, target=256):
    """Largest multiple of 128 that divides cout and is <= target, else full cout."""
    if cout <= target or cout % 128 != 0:
        return cout
    t = (target // 128) * 128
    while t >= 128:
        if cout % t == 0:
            return t
        t -= 128
    return cout


def _pick_row_tile(h, bytes_per_row, budget_bytes=4 << 20):
    """Rows per tile: keep the (input + output) block under budget and divide H."""
    th = int(max(1, min(h, budget_bytes // max(bytes_per_row, 1))))
    while th > 1 and h % th != 0:
        th -= 1
    return th


def wsconv2d_leaky(x, w, b, *, negative_slope=0.2):
    """Fused WSConv2d(3x3, stride 1, pad 1) + LeakyReLU.

    x: (N, H, W, Cin) NHWC, w: (3, 3, Cin, Cout) HWIO, b: (Cout,).
    Returns (N, H, W, Cout).
    """
    n, h, w_dim, cin = x.shape
    kh, kw, wcin, cout = w.shape
    assert (kh, kw) == (3, 3) and wcin == cin
    scale = float((2.0 / (cin * kh * kw)) ** 0.5)

    wp = w_dim + 2
    xp = jnp.pad(x, ((0, 0), (1, 1), (1, 1), (0, 0)))       # zero pad H and W by 1
    # Row expansion: x_rows[n, h, w, dy*Cin + c] = xp[n, h + dy, w, c]
    x_rows = jnp.concatenate([xp[:, dy:dy + h, :, :] for dy in range(3)], axis=-1)
    c3 = 3 * cin
    # Regroup weights per horizontal tap: w_r[dx, dy*Cin + c, co] = w[dy, dx, c, co]
    w_r = jnp.transpose(w, (1, 0, 2, 3)).reshape(3, c3, cout)
    b_r = b.reshape(1, cout)

    tco = _pick_cout_tile(cout)
    bytes_per_row = 4 * (wp * c3 + w_dim * tco)              # f32 in + out block per row
    th = _pick_row_tile(h, bytes_per_row)
    grid = (n, h // th, cout // tco)                         # Cout tiles innermost

    return pl.pallas_call(
        _wsconv_leaky_kernel(scale, negative_slope),
        out_shape=jax.ShapeDtypeStruct((n, h, w_dim, cout), x.dtype),
        grid=grid,
        in_specs=[
            # x tile is reused across the Cout-tile axis (index map ignores j).
            pl.BlockSpec((1, th, wp, c3), lambda bi, i, j: (bi, i, 0, 0)),
            pl.BlockSpec((3, c3, tco), lambda bi, i, j: (0, 0, j)),
            pl.BlockSpec((1, tco), lambda bi, i, j: (0, j)),
        ],
        out_specs=pl.BlockSpec((1, th, w_dim, tco), lambda bi, i, j: (bi, i, 0, j)),
        compiler_params=pltpu.CompilerParams(
            dimension_semantics=("parallel", "parallel", "parallel")),
    )(x_rows, w_r, b_r)


def conv_block(x_nchw, w1, b1, w2, b2, *, negative_slope=0.2):
    """PyTorch ConvBlock.forward: leaky(conv2(leaky(conv1(x)))), NCHW in/out."""
    x = jnp.transpose(x_nchw, (0, 2, 3, 1))                  # NCHW -> NHWC (C on lanes)
    y = wsconv2d_leaky(x, w1, b1, negative_slope=negative_slope)
    y = wsconv2d_leaky(y, w2, b2, negative_slope=negative_slope)
    return jnp.transpose(y, (0, 3, 1, 2))                    # back to NCHW


def conv_block_ref(x_nchw, w1, b1, w2, b2, *, negative_slope=0.2):
    """Pure-JAX reference mirroring the PyTorch module."""
    def ws(x, w, b):
        cin = w.shape[2]
        scale = (2.0 / (cin * 9)) ** 0.5
        y = jax.lax.conv_general_dilated(
            x * scale, w, window_strides=(1, 1), padding=((1, 1), (1, 1)),
            dimension_numbers=("NHWC", "HWIO", "NHWC"),
            precision=jax.lax.Precision.HIGHEST)
        return y + b.reshape(1, 1, 1, -1)

    x = jnp.transpose(x_nchw, (0, 2, 3, 1))
    y = ws(x, w1, b1)
    y = jnp.where(y >= 0, y, negative_slope * y)
    y = ws(y, w2, b2)
    y = jnp.where(y >= 0, y, negative_slope * y)
    return jnp.transpose(y, (0, 3, 1, 2))


if __name__ == "__main__":
    key = jax.random.PRNGKey(0)
    kx, kw1, kw2, kb1, kb2 = jax.random.split(key, 5)

    N, C_IN, C_OUT, H, W = 2, 4, 8, 16, 16
    x = jax.random.normal(kx, (N, C_IN, H, W), dtype=jnp.float32)
    # WSConv2d init is normal_ weights / zero biases; small random biases here
    # exercise the bias path while keeping the same forward semantics.
    w1 = jax.random.normal(kw1, (3, 3, C_IN, C_OUT), dtype=jnp.float32)
    b1 = 0.1 * jax.random.normal(kb1, (C_OUT,), dtype=jnp.float32)
    w2 = jax.random.normal(kw2, (3, 3, C_OUT, C_OUT), dtype=jnp.float32)
    b2 = 0.1 * jax.random.normal(kb2, (C_OUT,), dtype=jnp.float32)

    y = conv_block(x, w1, b1, w2, b2)
    jax.block_until_ready(y)

    y_ref = conv_block_ref(x, w1, b1, w2, b2)
    assert y.shape == (N, C_OUT, H, W) and y.dtype == x.dtype
    max_err = float(jnp.max(jnp.abs(y - y_ref)))
    assert jnp.allclose(y, y_ref, atol=5e-4, rtol=5e-4), (
        f"mismatch vs reference (max abs err {max_err})")

    print("KERNEL_OK")
</pallas_src>

<mosaic_0001>
module attributes {stable_mosaic.version = 11 : i64} {
  func.func @kernel(%arg0: i32, %arg1: i32, %arg2: i32, %arg3: memref<1x16x18x12xf32, #tpu.memory_space<vmem>>, %arg4: memref<3x12x8xf32, #tpu.memory_space<vmem>>, %arg5: memref<1x8xf32, #tpu.memory_space<vmem>>, %arg6: memref<1x16x16x8xf32, #tpu.memory_space<vmem>>) attributes {dimension_semantics = [#tpu.dimension_semantics<parallel>, #tpu.dimension_semantics<parallel>, #tpu.dimension_semantics<parallel>], iteration_bounds = array<i64: 2, 1, 1>, scalar_prefetch = 0 : i64, scratch_operands = 0 : i64, tpu.core_type = #tpu.core_type<tc>, window_params = [{transform_indices = @transform_0, window_bounds = array<i64: 1, 16, 18, 12>}, {transform_indices = @transform_1, window_bounds = array<i64: 3, 12, 8>}, {transform_indices = @transform_2, window_bounds = array<i64: 1, 8>}, {transform_indices = @transform_3, window_bounds = array<i64: 1, 16, 16, 8>}]} {
    %cst = arith.constant 0.000000e+00 : f32
    %0 = vector.broadcast %cst : f32 to vector<256x8xf32>
    %c0 = arith.constant 0 : index
    %c0_0 = arith.constant 0 : index
    %c0_1 = arith.constant 0 : index
    %c0_2 = arith.constant 0 : index
    %1 = vector.load %arg3[%c0, %c0_0, %c0_1, %c0_2] : memref<1x16x18x12xf32, #tpu.memory_space<vmem>>, vector<1x16x16x12xf32>
    %2 = vector.shape_cast %1 : vector<1x16x16x12xf32> to vector<16x16x12xf32>
    %cst_3 = arith.constant 0.235702261 : f32
    %3 = vector.broadcast %cst_3 : f32 to vector<16x16x12xf32>
    %4 = arith.mulf %2, %3 : vector<16x16x12xf32>
    %5 = vector.shape_cast %4 : vector<16x16x12xf32> to vector<256x12xf32>
    %c0_4 = arith.constant 0 : index
    %c0_5 = arith.constant 0 : index
    %c0_6 = arith.constant 0 : index
    %6 = vector.load %arg4[%c0_4, %c0_5, %c0_6] : memref<3x12x8xf32, #tpu.memory_space<vmem>>, vector<1x12x8xf32>
    %7 = vector.shape_cast %6 : vector<1x12x8xf32> to vector<12x8xf32>
    %cst_7 = arith.constant dense<0.000000e+00> : vector<256x8xf32>
    %8 = tpu.matmul %5, %7, %cst_7 {dimension_numbers = #tpu.dot_dimension_numbers<[1], [0], [0], [1], [0, 0, 1, 1], [], []>} : vector<256x12xf32>, vector<12x8xf32>, vector<256x8xf32> -> vector<256x8xf32>
    %9 = arith.addf %0, %8 : vector<256x8xf32>
    %c0_8 = arith.constant 0 : index
    %c0_9 = arith.constant 0 : index
    %c1 = arith.constant 1 : index
    %c0_10 = arith.constant 0 : index
    %10 = vector.load %arg3[%c0_8, %c0_9, %c1, %c0_10] : memref<1x16x18x12xf32, #tpu.memory_space<vmem>>, vector<1x16x16x12xf32>
    %11 = vector.shape_cast %10 : vector<1x16x16x12xf32> to vector<16x16x12xf32>
    %cst_11 = arith.constant 0.235702261 : f32
    %12 = vector.broadcast %cst_11 : f32 to vector<16x16x12xf32>
    %13 = arith.mulf %11, %12 : vector<16x16x12xf32>
    %14 = vector.shape_cast %13 : vector<16x16x12xf32> to vector<256x12xf32>
    %c1_12 = arith.constant 1 : index
    %c0_13 = arith.constant 0 : index
    %c0_14 = arith.constant 0 : index
    %15 = vector.load %arg4[%c1_12, %c0_13, %c0_14] : memref<3x12x8xf32, #tpu.memory_space<vmem>>, vector<1x12x8xf32>
    %16 = vector.shape_cast %15 : vector<1x12x8xf32> to vector<12x8xf32>
    %cst_15 = arith.constant dense<0.000000e+00> : vector<256x8xf32>
    %17 = tpu.matmul %14, %16, %cst_15 {dimension_numbers = #tpu.dot_dimension_numbers<[1], [0], [0], [1], [0, 0, 1, 1], [], []>} : vector<256x12xf32>, vector<12x8xf32>, vector<256x8xf32> -> vector<256x8xf32>
    %18 = arith.addf %9, %17 : vector<256x8xf32>
    %c0_16 = arith.constant 0 : index
    %c0_17 = arith.constant 0 : index
    %c2 = arith.constant 2 : index
    %c0_18 = arith.constant 0 : index
    %19 = vector.load %arg3[%c0_16, %c0_17, %c2, %c0_18] : memref<1x16x18x12xf32, #tpu.memory_space<vmem>>, vector<1x16x16x12xf32>
    %20 = vector.shape_cast %19 : vector<1x16x16x12xf32> to vector<16x16x12xf32>
    %cst_19 = arith.constant 0.235702261 : f32
    %21 = vector.broadcast %cst_19 : f32 to vector<16x16x12xf32>
    %22 = arith.mulf %20, %21 : vector<16x16x12xf32>
    %23 = vector.shape_cast %22 : vector<16x16x12xf32> to vector<256x12xf32>
    %c2_20 = arith.constant 2 : index
    %c0_21 = arith.constant 0 : index
    %c0_22 = arith.constant 0 : index
    %24 = vector.load %arg4[%c2_20, %c0_21, %c0_22] : memref<3x12x8xf32, #tpu.memory_space<vmem>>, vector<1x12x8xf32>
    %25 = vector.shape_cast %24 : vector<1x12x8xf32> to vector<12x8xf32>
    %cst_23 = arith.constant dense<0.000000e+00> : vector<256x8xf32>
    %26 = tpu.matmul %23, %25, %cst_23 {dimension_numbers = #tpu.dot_dimension_numbers<[1], [0], [0], [1], [0, 0, 1, 1], [], []>} : vector<256x12xf32>, vector<12x8xf32>, vector<256x8xf32> -> vector<256x8xf32>
    %27 = arith.addf %18, %26 : vector<256x8xf32>
    %c0_24 = arith.constant 0 : index
    %c0_25 = arith.constant 0 : index
    %28 = vector.load %arg5[%c0_24, %c0_25] : memref<1x8xf32, #tpu.memory_space<vmem>>, vector<1x8xf32>
    %29 = vector.broadcast %28 : vector<1x8xf32> to vector<256x8xf32>
    %30 = arith.addf %27, %29 : vector<256x8xf32>
    %cst_26 = arith.constant 0.000000e+00 : f32
    %31 = vector.broadcast %cst_26 : f32 to vector<256x8xf32>
    %32 = arith.cmpf oge, %30, %31 : vector<256x8xf32>
    %cst_27 = arith.constant 2.000000e-01 : f32
    %33 = vector.broadcast %cst_27 : f32 to vector<256x8xf32>
    %34 = arith.mulf %33, %30 : vector<256x8xf32>
    %35 = arith.select %32, %30, %34 : vector<256x8xi1>, vector<256x8xf32>
    %36 = vector.shape_cast %35 : vector<256x8xf32> to vector<1x16x16x8xf32>
    %c0_28 = arith.constant 0 : index
    %c0_29 = arith.constant 0 : index
    %c0_30 = arith.constant 0 : index
    %c0_31 = arith.constant 0 : index
    %37 = vector.load %arg6[%c0_28, %c0_29, %c0_30, %c0_31] : memref<1x16x16x8xf32, #tpu.memory_space<vmem>>, vector<1x16x16x8xf32>
    tpu.vector_store %arg6[%c0_28, %c0_29, %c0_30, %c0_31], %36 {strides = array<i32>} : memref<1x16x16x8xf32, #tpu.memory_space<vmem>>, vector<1x16x16x8xf32>,
    return
  }
  func.func @transform_0(%arg0: i32, %arg1: i32, %arg2: i32) -> (i32, i32, i32, i32) {
    %c0_i32 = arith.constant 0 : i32
    %c0_i32_0 = arith.constant 0 : i32
    %c0_i32_1 = arith.constant 0 : i32
    return %arg0, %arg1, %c0_i32, %c0_i32_0 : i32, i32, i32, i32
  }
  func.func @transform_1(%arg0: i32, %arg1: i32, %arg2: i32) -> (i32, i32, i32) {
    %c0_i32 = arith.constant 0 : i32
    %c0_i32_0 = arith.constant 0 : i32
    %c0_i32_1 = arith.constant 0 : i32
    return %c0_i32, %c0_i32_0, %arg2 : i32, i32, i32
  }
  func.func @transform_2(%arg0: i32, %arg1: i32, %arg2: i32) -> (i32, i32) {
    %c0_i32 = arith.constant 0 : i32
    %c0_i32_0 = arith.constant 0 : i32
    return %c0_i32, %arg2 : i32, i32
  }
  func.func @transform_3(%arg0: i32, %arg1: i32, %arg2: i32) -> (i32, i32, i32, i32) {
    %c0_i32 = arith.constant 0 : i32
    %c0_i32_0 = arith.constant 0 : i32
    return %arg0, %arg1, %c0_i32, %arg2 : i32, i32, i32, i32
  }
}

</mosaic_0001>

<llo_original>
// kernel: tpu_custom_call.1
$region0: #{tpu_custom_call.1}
  #allocation0 [shape = 'u32[]', space=smem, size = 0x4, offset = 0x4, fixed_abs, tag = 'smem constant byte address 0x4 - core index']
  #allocation1 [shape = 'u32[144,128]{1,0:T(1,128)}', space=vmem, size = 0x12000, scoped, tag = 'internal scratch']
  %s0 = inlined_call_operand.vmem [shape: f32[2,16,18,12], index: 0, kind: input, shape index: {}]
  %s1 = inlined_call_operand.vmem [shape: f32[3,12,8], index: 1, kind: input, shape index: {}]
  %s2 = inlined_call_operand.vmem [shape: f32[1,8], index: 2, kind: input, shape index: {}]
  %s3 = inlined_call_operand.vmem [shape: f32[2,16,16,8], index: 3, kind: output, shape index: {}]
  %s4 = sld [smem:[#allocation0]]
  $region45: #{tpu_custom_call.1} parent=0
    _
  %s6 = ssub.s32 1, %s4
  %s7 = scalar_select 0, %s6, %s4
  loop: start=0, step=1, limit=4
  $region2: #{tpu_custom_call.1} parent=0 // loop_pre_header
    _
  $region3: #{tpu_custom_call.1} parent=0 // loop_header
    %s9 = sphi 0, %s13
    %p10 = scmp.ge.s32.totalorder %s9, 4
    %s16 = sphi 0, %s35
    %s17 = sphi 0, %s31
    %s18 = sphi 0, %s27
    %s19 = sphi 0, %s16
    %s20 = sphi 0, %s17
    %s21 = sphi 0, %s18
    %s22 = sphi 0, %s19
    %s23 = sphi 0, %s20
    %s24 = sphi 0, %s21
    %s40 = sphi 0, %s42
    %s43 = sphi 0, %s40
    %s44 = sphi 0, %s43
    %s60 = sphi 0, %s44
    %s66 = sphi 0, %s68
    %s69 = sphi 0, %s66
    %s70 = sphi 0, %s69
    %s86 = sphi 0, %s70
    %s92 = sphi 0, %s94
    %s95 = sphi 0, %s92
    %s96 = sphi 0, %s95
    %s112 = sphi 0, %s96
    %s122 = sphi 0, %s124
    %s125 = sphi 0, %s122
    %s126 = sphi 0, %s125
    %s142 = sphi 0, %s126
  $region4: #{tpu_custom_call.1} parent=0 // loop_header_branch
    %12 = sbr.rel (%p10) target = $region8
  $region5: #{tpu_custom_call.1} parent=0 // loop_body
    %s14 = ssub.s32 %s9, 1
    %s15 = ssub.s32 %s9, 2
    %s25 = sadd.s32 1, %s18
    %p26 = scmp.ge.s32.totalorder %s25, 1
    %s27 = scalar_select %p26, 0, %s25
    %s28 = sadd.s32 1, %s17
    %s29 = scalar_select %p26, %s28, %s17
    %p30 = scmp.ge.s32.totalorder %s29, 1
    %s31 = scalar_select %p30, 0, %s29
    %s32 = sadd.s32 1, %s16
    %s33 = scalar_select %p30, %s32, %s16
    %p34 = scmp.ge.s32.totalorder %s33, 2
    %s35 = scalar_select %p34, 0, %s33
    %s36 = ssub.s32 %s16, %s35
    %s37 = ssub.s32 %s17, %s31
    %s38 = sor.u32 %s36, %s37
    %p39 = scmp.eq.s32.totalorder %s38, 0
    %s41 = sadd.s32 %s40, 1
    %s42 = scalar_select %p39, %s40, %s41
    %p45 = pneg %p39
    %p46 = scmp.eq.s32.totalorder %s9, 1
    %p47 = por %p45, %p46
    %p48 = scmp.ne.s32.totalorder %s40, %s43
    %p49 = scmp.eq.s32.totalorder %s9, 0
    %p50 = por %p48, %p49
    %p51 = scmp.ne.s32.totalorder %s40, %s43
    %p52 = scmp.eq.s32.totalorder %s14, 1
    %p53 = por %p51, %p52
    %p54 = scmp.ne.s32.totalorder %s43, %s44
    %p55 = scmp.eq.s32.totalorder %s14, 0
    %p56 = por %p54, %p55
    %p57 = scmp.ne.s32.totalorder %s43, %s44
    %p58 = scmp.eq.s32.totalorder %s15, 1
    %p59 = por %p57, %p58
    %p61 = scmp.ne.s32.totalorder %s44, %s60
    %p62 = scmp.eq.s32.totalorder %s15, 0
    %p63 = por %p61, %p62
    %s64 = ssub.s32 %s18, %s27
    %p65 = scmp.eq.s32.totalorder %s64, 0
    %s67 = sadd.s32 %s66, 1
    %s68 = scalar_select %p65, %s66, %s67
    %p71 = pneg %p65
    %p72 = scmp.eq.s32.totalorder %s9, 1
    %p73 = por %p71, %p72
    %p74 = scmp.ne.s32.totalorder %s66, %s69
    %p75 = scmp.eq.s32.totalorder %s9, 0
    %p76 = por %p74, %p75
    %p77 = scmp.ne.s32.totalorder %s66, %s69
    %p78 = scmp.eq.s32.totalorder %s14, 1
    %p79 = por %p77, %p78
    %p80 = scmp.ne.s32.totalorder %s69, %s70
    %p81 = scmp.eq.s32.totalorder %s14, 0
    %p82 = por %p80, %p81
    %p83 = scmp.ne.s32.totalorder %s69, %s70
    %p84 = scmp.eq.s32.totalorder %s15, 1
    %p85 = por %p83, %p84
    %p87 = scmp.ne.s32.totalorder %s70, %s86
    %p88 = scmp.eq.s32.totalorder %s15, 0
    %p89 = por %p87, %p88
    %s90 = ssub.s32 %s18, %s27
    %p91 = scmp.eq.s32.totalorder %s90, 0
    %s93 = sadd.s32 %s92, 1
    %s94 = scalar_select %p91, %s92, %s93
    %p97 = pneg %p91
    %p98 = scmp.eq.s32.totalorder %s9, 1
    %p99 = por %p97, %p98
    %p100 = scmp.ne.s32.totalorder %s92, %s95
    %p101 = scmp.eq.s32.totalorder %s9, 0
    %p102 = por %p100, %p101
    %p103 = scmp.ne.s32.totalorder %s92, %s95
    %p104 = scmp.eq.s32.totalorder %s14, 1
    %p105 = por %p103, %p104
    %p106 = scmp.ne.s32.totalorder %s95, %s96
    %p107 = scmp.eq.s32.totalorder %s14, 0
    %p108 = por %p106, %p107
    %p109 = scmp.ne.s32.totalorder %s95, %s96
    %p110 = scmp.eq.s32.totalorder %s15, 1
    %p111 = por %p109, %p110
    %p113 = scmp.ne.s32.totalorder %s96, %s112
    %p114 = scmp.eq.s32.totalorder %s15, 0
    %p115 = por %p113, %p114
    %s116 = ssub.s32 %s16, %s35
    %s117 = ssub.s32 %s17, %s31
    %s118 = sor.u32 %s116, %s117
    %s119 = ssub.s32 %s18, %s27
    %s120 = sor.u32 %s118, %s119
    %p121 = scmp.eq.s32.totalorder %s120, 0
    %s123 = sadd.s32 %s122, 1
    %s124 = scalar_select %p121, %s122, %s123
    %p127 = pneg %p121
    %p128 = scmp.eq.s32.totalorder %s9, 1
    %p129 = por %p127, %p128
    %p130 = scmp.ne.s32.totalorder %s122, %s125
    %p131 = scmp.eq.s32.totalorder %s9, 0
    %p132 = por %p130, %p131
    %p133 = scmp.ne.s32.totalorder %s122, %s125
    %p134 = scmp.eq.s32.totalorder %s14, 1
    %p135 = por %p133, %p134
    %p136 = scmp.ne.s32.totalorder %s125, %s126
    %p137 = scmp.eq.s32.totalorder %s14, 0
    %p138 = por %p136, %p137
    %p139 = scmp.ne.s32.totalorder %s125, %s126
    %p140 = scmp.eq.s32.totalorder %s15, 1
    %p141 = por %p139, %p140
    %p143 = scmp.ne.s32.totalorder %s126, %s142
    %p144 = scmp.eq.s32.totalorder %s15, 0
    %p145 = por %p143, %p144
    %p146 = scmp.le.s32.totalorder 1, %s9
    %p147 = scmp.lt.s32.totalorder %s9, 3
    %p148 = pnand %p146, %p147
    %p149 = pneg %p148
    // Predicated region
    $region9: #{tpu_custom_call.1} parent=5 // pred_check
      _
    $region10: #{tpu_custom_call.1} parent=5 // pred_check_branch
      %151 = sbr.rel (%p148) target = $region12
    $region11: #{tpu_custom_call.1} parent=5 // pred_region
      %s152 = ssub.s32 %s9, 1
      // Predicated region
      $region13: #{tpu_custom_call.1} parent=11 // pred_check
        %p153 = pneg %p82
      $region14: #{tpu_custom_call.1} parent=11 // pred_check_branch
        %155 = sbr.rel (%p153) target = $region16
      $region15: #{tpu_custom_call.1} parent=11 // pred_region
        %p156 = scmp.lt.s32.totalorder %s21, 0
        %s157 = scalar_select %p156, %s21, 0
        %s158 = smul.addr %s157, 8
        %s159 = scalar_lea.vmem %s1, %s158
      $region16: #{tpu_custom_call.1} parent=11 // pred_fallthru
        _
      // Predicated region
      $region17: #{tpu_custom_call.1} parent=11 // pred_check
        %p160 = pneg %p108
      $region18: #{tpu_custom_call.1} parent=11 // pred_check_branch
        %162 = sbr.rel (%p160) target = $region20
      $region19: #{tpu_custom_call.1} parent=11 // pred_region
        %p163 = scmp.lt.s32.totalorder %s21, 0
        %s164 = scalar_select %p163, %s21, 0
        %s165 = scalar_lea.vmem %s2, %s164
      $region20: #{tpu_custom_call.1} parent=11 // pred_fallthru
        _
    $region12: #{tpu_custom_call.1} parent=5 // pred_fallthru
      _
    %p166 = scmp.lt.s32.totalorder %s9, 2
    // Predicated region
    $region21: #{tpu_custom_call.1} parent=5 // pred_check
      %p167 = pneg %p166
    $region22: #{tpu_custom_call.1} parent=5 // pred_check_branch
      %169 = sbr.rel (%p167) target = $region24
    $region23: #{tpu_custom_call.1} parent=5 // pred_region
      // Predicated region
      $region25: #{tpu_custom_call.1} parent=23 // pred_check
        %p170 = pneg %p50
      $region26: #{tpu_custom_call.1} parent=23 // pred_check_branch
        %172 = sbr.rel (%p170) target = $region28
      $region27: #{tpu_custom_call.1} parent=23 // pred_region
        %s173 = smul.u32 16, %s17
        %p174 = scmp.lt.s32.totalorder %s16, 1
        %s175 = scalar_select %p174, %s16, 1
        %p176 = scmp.lt.s32.totalorder %s173, 15
        %s177 = scalar_select %p176, %s173, 15
        %s178 = smul.addr %s177, 3
        %s179 = smul.addr %s175, 48
        %s180 = sadd.s32 %s178, %s179
        %s181 = smul.addr %s180, 8
        %s182 = scalar_lea.vmem %s0, %s181
        %s183 = smul.u32 16, %s17
      $region28: #{tpu_custom_call.1} parent=23 // pred_fallthru
        _
    $region24: #{tpu_custom_call.1} parent=5 // pred_fallthru
      _
    %p184 = scmp.le.s32.totalorder 1, %s9
    %p185 = scmp.lt.s32.totalorder %s9, 3
    %p186 = pnand %p184, %p185
    %p187 = pneg %p186
    // Predicated region
    $region29: #{tpu_custom_call.1} parent=5 // pred_check
      _
    $region30: #{tpu_custom_call.1} parent=5 // pred_check_branch
      %189 = sbr.rel (%p186) target = $region32
    $region31: #{tpu_custom_call.1} parent=5 // pred_region
      %s190 = ssub.s32 %s9, 1
      %s191 = smul.u32 16, %s20
      %p192 = scmp.lt.s32.totalorder %s19, 1
      %s193 = scalar_select %p192, %s19, 1
      %p194 = scmp.lt.s32.totalorder %s191, 15
      %s195 = scalar_select %p194, %s191, 15
      %s196 = smul.addr %s195, 3
      %s197 = smul.addr %s193, 48
      %s198 = sadd.s32 %s196, %s197
      %s199 = smul.addr %s198, 8
      %s200 = scalar_lea.vmem %s0, %s199
      %p201 = pneg %p56
      %p202 = pneg %p53
      %p203 = scmp.lt.s32.totalorder %s21, 0
      %s204 = scalar_select %p203, %s21, 0
      %s205 = smul.addr %s204, 8
      %s206 = scalar_lea.vmem %s1, %s205
      %p207 = pneg %p82
      %p208 = pneg %p79
      %p209 = scmp.lt.s32.totalorder %s21, 0
      %s210 = scalar_select %p209, %s21, 0
      %s211 = scalar_lea.vmem %s2, %s210
      %p212 = pneg %p108
      %p213 = pneg %p105
      %p214 = pneg %p138
      %p215 = pneg %p135
      %s216 = smul.u32 16, %s20
      %p217 = scmp.lt.s32.totalorder %s19, 1
      %s218 = scalar_select %p217, %s19, 1
      %p219 = scmp.lt.s32.totalorder %s216, 15
      %s220 = scalar_select %p219, %s216, 15
      %p221 = scmp.lt.s32.totalorder %s21, 0
      %s222 = scalar_select %p221, %s21, 0
      %s223 = smul.addr %s220, 2
      %s224 = sadd.s32 %s222, %s223
      %s225 = smul.addr %s218, 32
      %s226 = sadd.s32 %s224, %s225
      %s227 = smul.addr %s226, 8
      %s228 = scalar_lea.vmem %s3, %s227
      %s229 = smul.u32 16, %s20
      %p230 = scmp.lt.s32.totalorder %s19, 1
      %s231 = scalar_select %p230, %s19, 1
      %p232 = scmp.lt.s32.totalorder %s229, 15
      %s233 = scalar_select %p232, %s229, 15
      %s234 = smul.addr %s233, 3
      %s235 = smul.addr %s231, 48
      %s236 = sadd.s32 %s234, %s235
      %s237 = smul.addr %s236, 8
      %s238 = scalar_lea.vmem %s0, %s237
      %s239 = smul.u32 16, %s20
      %p240 = scmp.lt.s32.totalorder %s21, 0
      %s241 = scalar_select %p240, %s21, 0
      %s242 = smul.addr %s241, 8
      %s243 = scalar_lea.vmem %s1, %s242
      %p244 = scmp.lt.s32.totalorder %s21, 0
      %s245 = scalar_select %p244, %s21, 0
      %s246 = scalar_lea.vmem %s2, %s245
      %s247 = smul.u32 16, %s20
      %p248 = scmp.lt.s32.totalorder %s19, 1
      %s249 = scalar_select %p248, %s19, 1
      %p250 = scmp.lt.s32.totalorder %s247, 15
      %s251 = scalar_select %p250, %s247, 15
      %p252 = scmp.lt.s32.totalorder %s21, 0
      %s253 = scalar_select %p252, %s21, 0
      %s254 = smul.addr %s251, 2
      %s255 = sadd.s32 %s253, %s254
      %s256 = smul.addr %s249, 32
      %s257 = sadd.s32 %s255, %s256
      %s258 = smul.addr %s257, 8
      %s259 = scalar_lea.vmem %s3, %s258
      %s260 = smul.u32 16, %s20
      %v261 = vld [vmem:[%s238] sm:$0xff]
      %v262 = vld [vmem:[%s238 + $0x8] sm:$0xff]
      %v263 = vld [vmem:[%s238 + $0x18] sm:$0xff]
      %v264 = vld [vmem:[%s238 + $0x20] sm:$0xff]
      %v265 = vld [vmem:[%s238 + $0x30] sm:$0xff]
      %v266 = vld [vmem:[%s238 + $0x38] sm:$0xff]
      %v267 = vld [vmem:[%s238 + $0x48] sm:$0xff]
      %v268 = vld [vmem:[%s238 + $0x50] sm:$0xff]
      %v269 = vld [vmem:[%s238 + $0x60] sm:$0xff]
      %v270 = vld [vmem:[%s238 + $0x68] sm:$0xff]
      %v271 = vld [vmem:[%s238 + $0x78] sm:$0xff]
      %v272 = vld [vmem:[%s238 + $0x80] sm:$0xff]
      %v273 = vld [vmem:[%s238 + $0x90] sm:$0xff]
      %v274 = vld [vmem:[%s238 + $0x98] sm:$0xff]
      %v275 = vld [vmem:[%s238 + $0xa8] sm:$0xff]
      %v276 = vld [vmem:[%s238 + $0xb0] sm:$0xff]
      %v277 = vld [vmem:[%s238 + $0xc0] sm:$0xff]
      %v278 = vld [vmem:[%s238 + $0xc8] sm:$0xff]
      %v279 = vld [vmem:[%s238 + $0xd8] sm:$0xff]
      %v280 = vld [vmem:[%s238 + $0xe0] sm:$0xff]
      %v281 = vld [vmem:[%s238 + $0xf0] sm:$0xff]
      %v282 = vld [vmem:[%s238 + $0xf8] sm:$0xff]
      %v283 = vld [vmem:[%s238 + $0x108] sm:$0xff]
      %v284 = vld [vmem:[%s238 + $0x110] sm:$0xff]
      %v285 = vld [vmem:[%s238 + $0x120] sm:$0xff]
      %v286 = vld [vmem:[%s238 + $0x128] sm:$0xff]
      %v287 = vld [vmem:[%s238 + $0x138] sm:$0xff]
      %v288 = vld [vmem:[%s238 + $0x140] sm:$0xff]
      %v289 = vld [vmem:[%s238 + $0x150] sm:$0xff]
      %v290 = vld [vmem:[%s238 + $0x158] sm:$0xff]
      %v291 = vld [vmem:[%s238 + $0x168] sm:$0xff]
      %v292 = vld [vmem:[%s238 + $0x170] sm:$0xff]
      %v293 = vmul.f32 %v261, 0.23570226
      %v294 = vmul.f32 %v262, 0.23570226
      %v295 = vmul.f32 %v263, 0.23570226
      %v296 = vmul.f32 %v264, 0.23570226
      %v297 = vmul.f32 %v265, 0.23570226
      %v298 = vmul.f32 %v266, 0.23570226
      %v299 = vmul.f32 %v267, 0.23570226
      %v300 = vmul.f32 %v268, 0.23570226
      %v301 = vmul.f32 %v269, 0.23570226
      %v302 = vmul.f32 %v270, 0.23570226
      %v303 = vmul.f32 %v271, 0.23570226
      %v304 = vmul.f32 %v272, 0.23570226
      %v305 = vmul.f32 %v273, 0.23570226
      %v306 = vmul.f32 %v274, 0.23570226
      %v307 = vmul.f32 %v275, 0.23570226
      %v308 = vmul.f32 %v276, 0.23570226
      %v309 = vmul.f32 %v277, 0.23570226
      %v310 = vmul.f32 %v278, 0.23570226
      %v311 = vmul.f32 %v279, 0.23570226
      %v312 = vmul.f32 %v280, 0.23570226
      %v313 = vmul.f32 %v281, 0.23570226
      %v314 = vmul.f32 %v282, 0.23570226
      %v315 = vmul.f32 %v283, 0.23570226
      %v316 = vmul.f32 %v284, 0.23570226
      %v317 = vmul.f32 %v285, 0.23570226
      %v318 = vmul.f32 %v286, 0.23570226
      %v319 = vmul.f32 %v287, 0.23570226
      %v320 = vmul.f32 %v288, 0.23570226
      %v321 = vmul.f32 %v289, 0.23570226
      %v322 = vmul.f32 %v290, 0.23570226
      %v323 = vmul.f32 %v291, 0.23570226
      %v324 = vmul.f32 %v292, 0.23570226
      %v325 = vld [vmem:[%s243] sm:$0xff]
      %v326 = vld [vmem:[%s243 + $0x8] sm:$0xf]
      %v327 = vld [vmem:[%s238 + $0x1] sm:$0xff]
      %v328 = vld [vmem:[%s238 + $0x9] sm:$0xff]
      %v329 = vld [vmem:[%s238 + $0x19] sm:$0xff]
      %v330 = vld [vmem:[%s238 + $0x21] sm:$0xff]
      %v331 = vld [vmem:[%s238 + $0x31] sm:$0xff]
      %v332 = vld [vmem:[%s238 + $0x39] sm:$0xff]
      %v333 = vld [vmem:[%s238 + $0x49] sm:$0xff]
      %v334 = vld [vmem:[%s238 + $0x51] sm:$0xff]
      %v335 = vld [vmem:[%s238 + $0x61] sm:$0xff]
      %v336 = vld [vmem:[%s238 + $0x69] sm:$0xff]
      %v337 = vld [vmem:[%s238 + $0x79] sm:$0xff]
      %v338 = vld [vmem:[%s238 + $0x81] sm:$0xff]
      %v339 = vld [vmem:[%s238 + $0x91] sm:$0xff]
      %v340 = vld [vmem:[%s238 + $0x99] sm:$0xff]
      %v341 = vld [vmem:[%s238 + $0xa9] sm:$0xff]
      %v342 = vld [vmem:[%s238 + $0xb1] sm:$0xff]
      %v343 = vld [vmem:[%s238 + $0xc1] sm:$0xff]
      %v344 = vld [vmem:[%s238 + $0xc9] sm:$0xff]
      %v345 = vld [vmem:[%s238 + $0xd9] sm:$0xff]
      %v346 = vld [vmem:[%s238 + $0xe1] sm:$0xff]
      %v347 = vld [vmem:[%s238 + $0xf1] sm:$0xff]
      %v348 = vld [vmem:[%s238 + $0xf9] sm:$0xff]
      %v349 = vld [vmem:[%s238 + $0x109] sm:$0xff]
      %v350 = vld [vmem:[%s238 + $0x111] sm:$0xff]
      %v351 = vld [vmem:[%s238 + $0x121] sm:$0xff]
      %v352 = vld [vmem:[%s238 + $0x129] sm:$0xff]
      %v353 = vld [vmem:[%s238 + $0x139] sm:$0xff]
      %v354 = vld [vmem:[%s238 + $0x141] sm:$0xff]
      %v355 = vld [vmem:[%s238 + $0x151] sm:$0xff]
      %v356 = vld [vmem:[%s238 + $0x159] sm:$0xff]
      %v357 = vld [vmem:[%s238 + $0x169] sm:$0xff]
      %v358 = vld [vmem:[%s238 + $0x171] sm:$0xff]
      %v359 = vmul.f32 %v327, 0.23570226
      %v360 = vmul.f32 %v328, 0.23570226
      %v361 = vmul.f32 %v329, 0.23570226
      %v362 = vmul.f32 %v330, 0.23570226
      %v363 = vmul.f32 %v331, 0.23570226
      %v364 = vmul.f32 %v332, 0.23570226
      %v365 = vmul.f32 %v333, 0.23570226
      %v366 = vmul.f32 %v334, 0.23570226
      %v367 = vmul.f32 %v335, 0.23570226
      %v368 = vmul.f32 %v336, 0.23570226
      %v369 = vmul.f32 %v337, 0.23570226
      %v370 = vmul.f32 %v338, 0.23570226
      %v371 = vmul.f32 %v339, 0.23570226
      %v372 = vmul.f32 %v340, 0.23570226
      %v373 = vmul.f32 %v341, 0.23570226
      %v374 = vmul.f32 %v342, 0.23570226
      %v375 = vmul.f32 %v343, 0.23570226
      %v376 = vmul.f32 %v344, 0.23570226
      %v377 = vmul.f32 %v345, 0.23570226
      %v378 = vmul.f32 %v346, 0.23570226
      %v379 = vmul.f32 %v347, 0.23570226
      %v380 = vmul.f32 %v348, 0.23570226
      %v381 = vmul.f32 %v349, 0.23570226
      %v382 = vmul.f32 %v350, 0.23570226
      %v383 = vmul.f32 %v351, 0.23570226
      %v384 = vmul.f32 %v352, 0.23570226
      %v385 = vmul.f32 %v353, 0.23570226
      %v386 = vmul.f32 %v354, 0.23570226
      %v387 = vmul.f32 %v355, 0.23570226
      %v388 = vmul.f32 %v356, 0.23570226
      %v389 = vmul.f32 %v357, 0.23570226
      %v390 = vmul.f32 %v358, 0.23570226
      %s391 = scalar_lea.vmem %s243, 16
      %v392 = vld [vmem:[%s391] sm:$0xff]
      %v393 = vld [vmem:[%s391 + $0x8] sm:$0xf]
      %vm394 = vcmask 97280
      %v396 = vsel %vm394, %v359, 0
      %v399 = vsel %vm394, %v360, 0
      %v402 = vsel %vm394, %v361, 0
      %v405 = vsel %vm394, %v362, 0
      %v408 = vsel %vm394, %v363, 0
      %v411 = vsel %vm394, %v364, 0
      %v414 = vsel %vm394, %v365, 0
      %v417 = vsel %vm394, %v366, 0
      %v420 = vsel %vm394, %v367, 0
      %v423 = vsel %vm394, %v368, 0
      %v426 = vsel %vm394, %v369, 0
      %v429 = vsel %vm394, %v370, 0
      %v432 = vsel %vm394, %v371, 0
      %v435 = vsel %vm394, %v372, 0
      %v438 = vsel %vm394, %v373, 0
      %v441 = vsel %vm394, %v374, 0
      %v444 = vsel %vm394, %v375, 0
      %v447 = vsel %vm394, %v376, 0
      %v450 = vsel %vm394, %v377, 0
      %v453 = vsel %vm394, %v378, 0
      %v456 = vsel %vm394, %v379, 0
      %v459 = vsel %vm394, %v380, 0
      %v462 = vsel %vm394, %v381, 0
      %v465 = vsel %vm394, %v382, 0
      %v468 = vsel %vm394, %v383, 0
      %v471 = vsel %vm394, %v384, 0
      %v474 = vsel %vm394, %v385, 0
      %v477 = vsel %vm394, %v386, 0
      %v480 = vsel %vm394, %v387, 0
      %v483 = vsel %vm394, %v388, 0
      %v486 = vsel %vm394, %v389, 0
      %v489 = vsel %vm394, %v390, 0
      %vm491 = vcmask 1043456
      %v493 = vsel %vm491, %v393, 0
      %495 = vmatprep.subr.mxu0 0.0
      %496 = vmatpush1.msra.mxu0 0.0
      %497 = vmatprep.subr.mxu0 0.0
      %498 = vmatpush1.msra.mxu0 0.0
      %499 = vmatprep.subr.mxu0 0.0
      %500 = vmatpush1.msra.mxu0 0.0
      %501 = vmatprep.subr.mxu0 0.0
      %502 = vmatpush1.msra.mxu0 0.0
      %503 = vmatprep.subr.mxu0 0.0
      %504 = vmatpush1.msra.mxu0 0.0
      %505 = vmatprep.subr.mxu0 0.0
      %506 = vmatpush1.msra.mxu0 0.0
      %507 = vmatprep.subr.mxu0 0.0
      %508 = vmatpush1.msra.mxu0 0.0
      %509 = vmatprep.subr.mxu0 0.0
      %510 = vmatpush1.msra.mxu0 0.0
      %511 = vmatprep.subr.mxu0 0.0
      %512 = vmatpush1.msra.mxu0 0.0
      %513 = vmatprep.subr.mxu0 0.0
      %514 = vmatpush1.msra.mxu0 0.0
      %515 = vmatprep.subr.mxu0 0.0
      %516 = vmatpush1.msra.mxu0 0.0
      %517 = vmatprep.subr.mxu0 0.0
      %518 = vmatpush1.msra.mxu0 0.0
      %519 = vmatprep.subr.mxu0 0.0
      %520 = vmatpush1.msra.mxu0 0.0
      %521 = vmatprep.subr.mxu0 0.0
      %522 = vmatpush1.msra.mxu0 0.0
      %523 = vmatprep.subr.mxu0 0.0
      %524 = vmatpush1.msra.mxu0 %v493
      %525 = vmatprep.subr.mxu0 0.0
      %526 = vmatpush1.msra.mxu0 %v392
      %527 = vmatprep.subr.mxu0 0.0
      %528 = vmatpush2.msra.mxu0 0.0
      %529 = vmatprep.subr.mxu0 0.0
      %530 = vmatpush2.msra.mxu0 0.0
      %531 = vmatprep.subr.mxu0 0.0
      %532 = vmatpush2.msra.mxu0 0.0
      %533 = vmatprep.subr.mxu0 0.0
      %534 = vmatpush2.msra.mxu0 0.0
      %535 = vmatprep.subr.mxu0 0.0
      %536 = vmatpush2.msra.mxu0 0.0
      %537 = vmatprep.subr.mxu0 0.0
      %538 = vmatpush2.msra.mxu0 0.0
      %539 = vmatprep.subr.mxu0 0.0
      %540 = vmatpush2.msra.mxu0 0.0
      %541 = vmatprep.subr.mxu0 0.0
      %542 = vmatpush2.msra.mxu0 0.0
      %543 = vmatprep.subr.mxu0 0.0
      %544 = vmatpush2.msra.mxu0 0.0
      %545 = vmatprep.subr.mxu0 0.0
      %546 = vmatpush2.msra.mxu0 0.0
      %547 = vmatprep.subr.mxu0 0.0
      %548 = vmatpush2.msra.mxu0 0.0
      %549 = vmatprep.subr.mxu0 0.0
      %550 = vmatpush2.msra.mxu0 0.0
      %551 = vmatprep.subr.mxu0 0.0
      %552 = vmatpush2.msra.mxu0 0.0
      %553 = vmatprep.subr.mxu0 0.0
      %554 = vmatpush2.msra.mxu0 0.0
      %555 = vmatprep.subr.mxu0 0.0
      %556 = vmatpush2.msra.mxu0 0.0
      %557 = vmatprep.subr.mxu0 0.0
      %558 = vmatpush2.msra.mxu0 0.0
      %559 = vmatprep.mubr.f32.mxu0 0.0
      %560 = vmatmul.mubr.f32.gmra.mxu0 %v396
      %v561 = vpop.f32.mrf.mxu0
      %v562 = vadd.f32 0.0, %v561
      %v563 = vpop.f32.mrf.mxu0
      %564 = vmatprep.mubr.f32.mxu0 0.0
      %565 = vmatmul.mubr.f32.gmra.mxu0 %v399
      %v566 = vpop.f32.mrf.mxu0
      %v567 = vadd.f32 0.0, %v566
      %v568 = vpop.f32.mrf.mxu0
      %569 = vmatprep.mubr.f32.mxu0 0.0
      %570 = vmatmul.mubr.f32.gmra.mxu0 %v402
      %v571 = vpop.f32.mrf.mxu0
      %v572 = vadd.f32 0.0, %v571
      %v573 = vpop.f32.mrf.mxu0
      %574 = vmatprep.mubr.f32.mxu0 0.0
      %575 = vmatmul.mubr.f32.gmra.mxu0 %v405
      %v576 = vpop.f32.mrf.mxu0
      %v577 = vadd.f32 0.0, %v576
      %v578 = vpop.f32.mrf.mxu0
      %579 = vmatprep.mubr.f32.mxu0 0.0
      %580 = vmatmul.mubr.f32.gmra.mxu0 %v408
      %v581 = vpop.f32.mrf.mxu0
      %v582 = vadd.f32 0.0, %v581
      %v583 = vpop.f32.mrf.mxu0
      %584 = vmatprep.mubr.f32.mxu0 0.0
      %585 = vmatmul.mubr.f32.gmra.mxu0 %v411
      %v586 = vpop.f32.mrf.mxu0
      %v587 = vadd.f32 0.0, %v586
      %v588 = vpop.f32.mrf.mxu0
      %589 = vmatprep.mubr.f32.mxu0 0.0
      %590 = vmatmul.mubr.f32.gmra.mxu0 %v414
      %v591 = vpop.f32.mrf.mxu0
      %v592 = vadd.f32 0.0, %v591
      %v593 = vpop.f32.mrf.mxu0
      %594 = vmatprep.mubr.f32.mxu0 0.0
      %595 = vmatmul.mubr.f32.gmra.mxu0 %v417
      %v596 = vpop.f32.mrf.mxu0
      %v597 = vadd.f32 0.0, %v596
      %v598 = vpop.f32.mrf.mxu0
      %599 = vmatprep.mubr.f32.mxu0 0.0
      %600 = vmatmul.mubr.f32.gmra.mxu0 %v420
      %v601 = vpop.f32.mrf.mxu0
      %v602 = vadd.f32 0.0, %v601
      %v603 = vpop.f32.mrf.mxu0
      %604 = vmatprep.mubr.f32.mxu0 0.0
      %605 = vmatmul.mubr.f32.gmra.mxu0 %v423
      %v606 = vpop.f32.mrf.mxu0
      %v607 = vadd.f32 0.0, %v606
      %v608 = vpop.f32.mrf.mxu0
      %609 = vmatprep.mubr.f32.mxu0 0.0
      %610 = vmatmul.mubr.f32.gmra.mxu0 %v426
      %v611 = vpop.f32.mrf.mxu0
      %v612 = vadd.f32 0.0, %v611
      %v613 = vpop.f32.mrf.mxu0
      %614 = vmatprep.mubr.f32.mxu0 0.0
      %615 = vmatmul.mubr.f32.gmra.mxu0 %v429
      %v616 = vpop.f32.mrf.mxu0
      %v617 = vadd.f32 0.0, %v616
      %v618 = vpop.f32.mrf.mxu0
      %619 = vmatprep.mubr.f32.mxu0 0.0
      %620 = vmatmul.mubr.f32.gmra.mxu0 %v432
      %v621 = vpop.f32.mrf.mxu0
      %v622 = vadd.f32 0.0, %v621
      %v623 = vpop.f32.mrf.mxu0
      %624 = vmatprep.mubr.f32.mxu0 0.0
      %625 = vmatmul.mubr.f32.gmra.mxu0 %v435
      %v626 = vpop.f32.mrf.mxu0
      %v627 = vadd.f32 0.0, %v626
      %v628 = vpop.f32.mrf.mxu0
      %629 = vmatprep.mubr.f32.mxu0 0.0
      %630 = vmatmul.mubr.f32.gmra.mxu0 %v438
      %v631 = vpop.f32.mrf.mxu0
      %v632 = vadd.f32 0.0, %v631
      %v633 = vpop.f32.mrf.mxu0
      %634 = vmatprep.mubr.f32.mxu0 0.0
      %635 = vmatmul.mubr.f32.gmra.mxu0 %v441
      %v636 = vpop.f32.mrf.mxu0
      %v637 = vadd.f32 0.0, %v636
      %v638 = vpop.f32.mrf.mxu0
      %639 = vmatprep.mubr.f32.mxu0 0.0
      %640 = vmatmul.mubr.f32.gmra.mxu0 %v444
      %v641 = vpop.f32.mrf.mxu0
      %v642 = vadd.f32 0.0, %v641
      %v643 = vpop.f32.mrf.mxu0
      %644 = vmatprep.mubr.f32.mxu0 0.0
      %645 = vmatmul.mubr.f32.gmra.mxu0 %v447
      %v646 = vpop.f32.mrf.mxu0
      %v647 = vadd.f32 0.0, %v646
      %v648 = vpop.f32.mrf.mxu0
      %649 = vmatprep.mubr.f32.mxu0 0.0
      %650 = vmatmul.mubr.f32.gmra.mxu0 %v450
      %v651 = vpop.f32.mrf.mxu0
      %v652 = vadd.f32 0.0, %v651
      %v653 = vpop.f32.mrf.mxu0
      %654 = vmatprep.mubr.f32.mxu0 0.0
      %655 = vmatmul.mubr.f32.gmra.mxu0 %v453
      %v656 = vpop.f32.mrf.mxu0
      %v657 = vadd.f32 0.0, %v656
      %v658 = vpop.f32.mrf.mxu0
      %659 = vmatprep.mubr.f32.mxu0 0.0
      %660 = vmatmul.mubr.f32.gmra.mxu0 %v456
      %v661 = vpop.f32.mrf.mxu0
      %v662 = vadd.f32 0.0, %v661
      %v663 = vpop.f32.mrf.mxu0
      %664 = vmatprep.mubr.f32.mxu0 0.0
      %665 = vmatmul.mubr.f32.gmra.mxu0 %v459
      %v666 = vpop.f32.mrf.mxu0
      %v667 = vadd.f32 0.0, %v666
      %v668 = vpop.f32.mrf.mxu0
      %669 = vmatprep.mubr.f32.mxu0 0.0
      %670 = vmatmul.mubr.f32.gmra.mxu0 %v462
      %v671 = vpop.f32.mrf.mxu0
      %v672 = vadd.f32 0.0, %v671
      %v673 = vpop.f32.mrf.mxu0
      %674 = vmatprep.mubr.f32.mxu0 0.0
      %675 = vmatmul.mubr.f32.gmra.mxu0 %v465
      %v676 = vpop.f32.mrf.mxu0
      %v677 = vadd.f32 0.0, %v676
      %v678 = vpop.f32.mrf.mxu0
      %679 = vmatprep.mubr.f32.mxu0 0.0
      %680 = vmatmul.mubr.f32.gmra.mxu0 %v468
      %v681 = vpop.f32.mrf.mxu0
      %v682 = vadd.f32 0.0, %v681
      %v683 = vpop.f32.mrf.mxu0
      %684 = vmatprep.mubr.f32.mxu0 0.0
      %685 = vmatmul.mubr.f32.gmra.mxu0 %v471
      %v686 = vpop.f32.mrf.mxu0
      %v687 = vadd.f32 0.0, %v686
      %v688 = vpop.f32.mrf.mxu0
      %689 = vmatprep.mubr.f32.mxu0 0.0
      %690 = vmatmul.mubr.f32.gmra.mxu0 %v474
      %v691 = vpop.f32.mrf.mxu0
      %v692 = vadd.f32 0.0, %v691
      %v693 = vpop.f32.mrf.mxu0
      %694 = vmatprep.mubr.f32.mxu0 0.0
      %695 = vmatmul.mubr.f32.gmra.mxu0 %v477
      %v696 = vpop.f32.mrf.mxu0
      %v697 = vadd.f32 0.0, %v696
      %v698 = vpop.f32.mrf.mxu0
      %699 = vmatprep.mubr.f32.mxu0 0.0
      %700 = vmatmul.mubr.f32.gmra.mxu0 %v480
      %v701 = vpop.f32.mrf.mxu0
      %v702 = vadd.f32 0.0, %v701
      %v703 = vpop.f32.mrf.mxu0
      %704 = vmatprep.mubr.f32.mxu0 0.0
      %705 = vmatmul.mubr.f32.gmra.mxu0 %v483
      %v706 = vpop.f32.mrf.mxu0
      %v707 = vadd.f32 0.0, %v706
      %v708 = vpop.f32.mrf.mxu0
      %709 = vmatprep.mubr.f32.mxu0 0.0
      %710 = vmatmul.mubr.f32.gmra.mxu0 %v486
      %v711 = vpop.f32.mrf.mxu0
      %v712 = vadd.f32 0.0, %v711
      %v713 = vpop.f32.mrf.mxu0
      %714 = vmatprep.mubr.f32.mxu0 0.0
      %715 = vmatmul.mubr.f32.gmra.mxu0 %v489
      %v716 = vpop.f32.mrf.mxu0
      %v717 = vadd.f32 0.0, %v716
      %v718 = vpop.f32.mrf.mxu0
      %719 = vdwg.mxu0
      %v721 = vsel %vm394, %v293, 0
      %v724 = vsel %vm394, %v294, 0
      %v727 = vsel %vm394, %v295, 0
      %v730 = vsel %vm394, %v296, 0
      %v733 = vsel %vm394, %v297, 0
      %v736 = vsel %vm394, %v298, 0
      %v739 = vsel %vm394, %v299, 0
      %v742 = vsel %vm394, %v300, 0
      %v745 = vsel %vm394, %v301, 0
      %v748 = vsel %vm394, %v302, 0
      %v751 = vsel %vm394, %v303, 0
      %v754 = vsel %vm394, %v304, 0
      %v757 = vsel %vm394, %v305, 0
      %v760 = vsel %vm394, %v306, 0
      %v763 = vsel %vm394, %v307, 0
      %v766 = vsel %vm394, %v308, 0
      %v769 = vsel %vm394, %v309, 0
      %v772 = vsel %vm394, %v310, 0
      %v775 = vsel %vm394, %v311, 0
      %v778 = vsel %vm394, %v312, 0
      %v781 = vsel %vm394, %v313, 0
      %v784 = vsel %vm394, %v314, 0
      %v787 = vsel %vm394, %v315, 0
      %v790 = vsel %vm394, %v316, 0
      %v793 = vsel %vm394, %v317, 0
      %v796 = vsel %vm394, %v318, 0
      %v799 = vsel %vm394, %v319, 0
      %v802 = vsel %vm394, %v320, 0
      %v805 = vsel %vm394, %v321, 0
      %v808 = vsel %vm394, %v322, 0
      %v811 = vsel %vm394, %v323, 0
      %v814 = vsel %vm394, %v324, 0
      %v817 = vsel %vm491, %v326, 0
      %819 = vmatprep.subr.mxu0 0.0
      %820 = vmatpush1.msra.mxu0 0.0
      %821 = vmatprep.subr.mxu0 0.0
      %822 = vmatpush1.msra.mxu0 0.0
      %823 = vmatprep.subr.mxu0 0.0
      %824 = vmatpush1.msra.mxu0 0.0
      %825 = vmatprep.subr.mxu0 0.0
      %826 = vmatpush1.msra.mxu0 0.0
      %827 = vmatprep.subr.mxu0 0.0
      %828 = vmatpush1.msra.mxu0 0.0
      %829 = vmatprep.subr.mxu0 0.0
      %830 = vmatpush1.msra.mxu0 0.0
      %831 = vmatprep.subr.mxu0 0.0
      %832 = vmatpush1.msra.mxu0 0.0
      %833 = vmatprep.subr.mxu0 0.0
      %834 = vmatpush1.msra.mxu0 0.0
      %835 = vmatprep.subr.mxu0 0.0
      %836 = vmatpush1.msra.mxu0 0.0
      %837 = vmatprep.subr.mxu0 0.0
      %838 = vmatpush1.msra.mxu0 0.0
      %839 = vmatprep.subr.mxu0 0.0
      %840 = vmatpush1.msra.mxu0 0.0
      %841 = vmatprep.subr.mxu0 0.0
      %842 = vmatpush1.msra.mxu0 0.0
      %843 = vmatprep.subr.mxu0 0.0
      %844 = vmatpush1.msra.mxu0 0.0
      %845 = vmatprep.subr.mxu0 0.0
      %846 = vmatpush1.msra.mxu0 0.0
      %847 = vmatprep.subr.mxu0 0.0
      %848 = vmatpush1.msra.mxu0 %v817
      %849 = vmatprep.subr.mxu0 0.0
      %850 = vmatpush1.msra.mxu0 %v325
      %851 = vmatprep.subr.mxu0 0.0
      %852 = vmatpush2.msra.mxu0 0.0
      %853 = vmatprep.subr.mxu0 0.0
      %854 = vmatpush2.msra.mxu0 0.0
      %855 = vmatprep.subr.mxu0 0.0
      %856 = vmatpush2.msra.mxu0 0.0
      %857 = vmatprep.subr.mxu0 0.0
      %858 = vmatpush2.msra.mxu0 0.0
      %859 = vmatprep.subr.mxu0 0.0
      %860 = vmatpush2.msra.mxu0 0.0
      %861 = vmatprep.subr.mxu0 0.0
      %862 = vmatpush2.msra.mxu0 0.0
      %863 = vmatprep.subr.mxu0 0.0
      %864 = vmatpush2.msra.mxu0 0.0
      %865 = vmatprep.subr.mxu0 0.0
      %866 = vmatpush2.msra.mxu0 0.0
      %867 = vmatprep.subr.mxu0 0.0
      %868 = vmatpush2.msra.mxu0 0.0
      %869 = vmatprep.subr.mxu0 0.0
      %870 = vmatpush2.msra.mxu0 0.0
      %871 = vmatprep.subr.mxu0 0.0
      %872 = vmatpush2.msra.mxu0 0.0
      %873 = vmatprep.subr.mxu0 0.0
      %874 = vmatpush2.msra.mxu0 0.0
      %875 = vmatprep.subr.mxu0 0.0
      %876 = vmatpush2.msra.mxu0 0.0
      %877 = vmatprep.subr.mxu0 0.0
      %878 = vmatpush2.msra.mxu0 0.0
      %879 = vmatprep.subr.mxu0 0.0
      %880 = vmatpush2.msra.mxu0 0.0
      %881 = vmatprep.subr.mxu0 0.0
      %882 = vmatpush2.msra.mxu0 0.0
      %883 = vmatprep.mubr.f32.mxu0 0.0
      %884 = vmatmul.mubr.f32.gmra.mxu0 %v721
      %v885 = vpop.f32.mrf.mxu0
      %v886 = vadd.f32 %v562, %v885
      %v887 = vpop.f32.mrf.mxu0
      %888 = vmatprep.mubr.f32.mxu0 0.0
      %889 = vmatmul.mubr.f32.gmra.mxu0 %v724
      %v890 = vpop.f32.mrf.mxu0
      %v891 = vadd.f32 %v567, %v890
      %v892 = vpop.f32.mrf.mxu0
      %893 = vmatprep.mubr.f32.mxu0 0.0
      %894 = vmatmul.mubr.f32.gmra.mxu0 %v727
      %v895 = vpop.f32.mrf.mxu0
      %v896 = vadd.f32 %v572, %v895
      %v897 = vpop.f32.mrf.mxu0
      %898 = vmatprep.mubr.f32.mxu0 0.0
      %899 = vmatmul.mubr.f32.gmra.mxu0 %v730
      %v900 = vpop.f32.mrf.mxu0
      %v901 = vadd.f32 %v577, %v900
      %v902 = vpop.f32.mrf.mxu0
      %903 = vmatprep.mubr.f32.mxu0 0.0
      %904 = vmatmul.mubr.f32.gmra.mxu0 %v733
      %v905 = vpop.f32.mrf.mxu0
      %v906 = vadd.f32 %v582, %v905
      %v907 = vpop.f32.mrf.mxu0
      %908 = vmatprep.mubr.f32.mxu0 0.0
      %909 = vmatmul.mubr.f32.gmra.mxu0 %v736
      %v910 = vpop.f32.mrf.mxu0
      %v911 = vadd.f32 %v587, %v910
      %v912 = vpop.f32.mrf.mxu0
      %913 = vmatprep.mubr.f32.mxu0 0.0
      %914 = vmatmul.mubr.f32.gmra.mxu0 %v739
      %v915 = vpop.f32.mrf.mxu0
      %v916 = vadd.f32 %v592, %v915
      %v917 = vpop.f32.mrf.mxu0
      %918 = vmatprep.mubr.f32.mxu0 0.0
      %919 = vmatmul.mubr.f32.gmra.mxu0 %v742
      %v920 = vpop.f32.mrf.mxu0
      %v921 = vadd.f32 %v597, %v920
      %v922 = vpop.f32.mrf.mxu0
      %923 = vmatprep.mubr.f32.mxu0 0.0
      %924 = vmatmul.mubr.f32.gmra.mxu0 %v745
      %v925 = vpop.f32.mrf.mxu0
      %v926 = vadd.f32 %v602, %v925
      %v927 = vpop.f32.mrf.mxu0
      %928 = vmatprep.mubr.f32.mxu0 0.0
      %929 = vmatmul.mubr.f32.gmra.mxu0 %v748
      %v930 = vpop.f32.mrf.mxu0
      %v931 = vadd.f32 %v607, %v930
      %v932 = vpop.f32.mrf.mxu0
      %933 = vmatprep.mubr.f32.mxu0 0.0
      %934 = vmatmul.mubr.f32.gmra.mxu0 %v751
      %v935 = vpop.f32.mrf.mxu0
      %v936 = vadd.f32 %v612, %v935
      %v937 = vpop.f32.mrf.mxu0
      %938 = vmatprep.mubr.f32.mxu0 0.0
      %939 = vmatmul.mubr.f32.gmra.mxu0 %v754
      %v940 = vpop.f32.mrf.mxu0
      %v941 = vadd.f32 %v617, %v940
      %v942 = vpop.f32.mrf.mxu0
      %943 = vmatprep.mubr.f32.mxu0 0.0
      %944 = vmatmul.mubr.f32.gmra.mxu0 %v757
      %v945 = vpop.f32.mrf.mxu0
      %v946 = vadd.f32 %v622, %v945
      %v947 = vpop.f32.mrf.mxu0
      %948 = vmatprep.mubr.f32.mxu0 0.0
      %949 = vmatmul.mubr.f32.gmra.mxu0 %v760
      %v950 = vpop.f32.mrf.mxu0
      %v951 = vadd.f32 %v627, %v950
      %v952 = vpop.f32.mrf.mxu0
      %953 = vmatprep.mubr.f32.mxu0 0.0
      %954 = vmatmul.mubr.f32.gmra.mxu0 %v763
      %v955 = vpop.f32.mrf.mxu0
      %v956 = vadd.f32 %v632, %v955
      %v957 = vpop.f32.mrf.mxu0
      %958 = vmatprep.mubr.f32.mxu0 0.0
      %959 = vmatmul.mubr.f32.gmra.mxu0 %v766
      %v960 = vpop.f32.mrf.mxu0
      %v961 = vadd.f32 %v637, %v960
      %v962 = vpop.f32.mrf.mxu0
      %963 = vmatprep.mubr.f32.mxu0 0.0
      %964 = vmatmul.mubr.f32.gmra.mxu0 %v769
      %v965 = vpop.f32.mrf.mxu0
      %v966 = vadd.f32 %v642, %v965
      %v967 = vpop.f32.mrf.mxu0
      %968 = vmatprep.mubr.f32.mxu0 0.0
      %969 = vmatmul.mubr.f32.gmra.mxu0 %v772
      %v970 = vpop.f32.mrf.mxu0
      %v971 = vadd.f32 %v647, %v970
      %v972 = vpop.f32.mrf.mxu0
      %973 = vmatprep.mubr.f32.mxu0 0.0
      %974 = vmatmul.mubr.f32.gmra.mxu0 %v775
      %v975 = vpop.f32.mrf.mxu0
      %v976 = vadd.f32 %v652, %v975
      %v977 = vpop.f32.mrf.mxu0
      %978 = vmatprep.mubr.f32.mxu0 0.0
      %979 = vmatmul.mubr.f32.gmra.mxu0 %v778
      %v980 = vpop.f32.mrf.mxu0
      %v981 = vadd.f32 %v657, %v980
      %v982 = vpop.f32.mrf.mxu0
      %983 = vmatprep.mubr.f32.mxu0 0.0
      %984 = vmatmul.mubr.f32.gmra.mxu0 %v781
      %v985 = vpop.f32.mrf.mxu0
      %v986 = vadd.f32 %v662, %v985
      %v987 = vpop.f32.mrf.mxu0
      %988 = vmatprep.mubr.f32.mxu0 0.0
      %989 = vmatmul.mubr.f32.gmra.mxu0 %v784
      %v990 = vpop.f32.mrf.mxu0
      %v991 = vadd.f32 %v667, %v990
      %v992 = vpop.f32.mrf.mxu0
      %993 = vmatprep.mubr.f32.mxu0 0.0
      %994 = vmatmul.mubr.f32.gmra.mxu0 %v787
      %v995 = vpop.f32.mrf.mxu0
      %v996 = vadd.f32 %v672, %v995
      %v997 = vpop.f32.mrf.mxu0
      %998 = vmatprep.mubr.f32.mxu0 0.0
      %999 = vmatmul.mubr.f32.gmra.mxu0 %v790
      %v1000 = vpop.f32.mrf.mxu0
      %v1001 = vadd.f32 %v677, %v1000
      %v1002 = vpop.f32.mrf.mxu0
      %1003 = vmatprep.mubr.f32.mxu0 0.0
      %1004 = vmatmul.mubr.f32.gmra.mxu0 %v793
      %v1005 = vpop.f32.mrf.mxu0
      %v1006 = vadd.f32 %v682, %v1005
      %v1007 = vpop.f32.mrf.mxu0
      %1008 = vmatprep.mubr.f32.mxu0 0.0
      %1009 = vmatmul.mubr.f32.gmra.mxu0 %v796
      %v1010 = vpop.f32.mrf.mxu0
      %v1011 = vadd.f32 %v687, %v1010
      %v1012 = vpop.f32.mrf.mxu0
      %1013 = vmatprep.mubr.f32.mxu0 0.0
      %1014 = vmatmul.mubr.f32.gmra.mxu0 %v799
      %v1015 = vpop.f32.mrf.mxu0
      %v1016 = vadd.f32 %v692, %v1015
      %v1017 = vpop.f32.mrf.mxu0
      %1018 = vmatprep.mubr.f32.mxu0 0.0
      %1019 = vmatmul.mubr.f32.gmra.mxu0 %v802
      %v1020 = vpop.f32.mrf.mxu0
      %v1021 = vadd.f32 %v697, %v1020
      %v1022 = vpop.f32.mrf.mxu0
      %1023 = vmatprep.mubr.f32.mxu0 0.0
      %1024 = vmatmul.mubr.f32.gmra.mxu0 %v805
      %v1025 = vpop.f32.mrf.mxu0
      %v1026 = vadd.f32 %v702, %v1025
      %v1027 = vpop.f32.mrf.mxu0
      %1028 = vmatprep.mubr.f32.mxu0 0.0
      %1029 = vmatmul.mubr.f32.gmra.mxu0 %v808
      %v1030 = vpop.f32.mrf.mxu0
      %v1031 = vadd.f32 %v707, %v1030
      %v1032 = vpop.f32.mrf.mxu0
      %1033 = vmatprep.mubr.f32.mxu0 0.0
      %1034 = vmatmul.mubr.f32.gmra.mxu0 %v811
      %v1035 = vpop.f32.mrf.mxu0
      %v1036 = vadd.f32 %v712, %v1035
      %v1037 = vpop.f32.mrf.mxu0
      %1038 = vmatprep.mubr.f32.mxu0 0.0
      %1039 = vmatmul.mubr.f32.gmra.mxu0 %v814
      %v1040 = vpop.f32.mrf.mxu0
      %v1041 = vadd.f32 %v717, %v1040
      %v1042 = vpop.f32.mrf.mxu0
      %1043 = vdwg.mxu0
      %v1044 = vld [vmem:[%s238 + $0x2] sm:$0xff]
      %v1045 = vld [vmem:[%s238 + $0xa] sm:$0xff]
      %v1046 = vld [vmem:[%s238 + $0x1a] sm:$0xff]
      %v1047 = vld [vmem:[%s238 + $0x22] sm:$0xff]
      %v1048 = vld [vmem:[%s238 + $0x32] sm:$0xff]
      %v1049 = vld [vmem:[%s238 + $0x3a] sm:$0xff]
      %v1050 = vld [vmem:[%s238 + $0x4a] sm:$0xff]
      %v1051 = vld [vmem:[%s238 + $0x52] sm:$0xff]
      %v1052 = vld [vmem:[%s238 + $0x62] sm:$0xff]
      %v1053 = vld [vmem:[%s238 + $0x6a] sm:$0xff]
      %v1054 = vld [vmem:[%s238 + $0x7a] sm:$0xff]
      %v1055 = vld [vmem:[%s238 + $0x82] sm:$0xff]
      %v1056 = vld [vmem:[%s238 + $0x92] sm:$0xff]
      %v1057 = vld [vmem:[%s238 + $0x9a] sm:$0xff]
      %v1058 = vld [vmem:[%s238 + $0xaa] sm:$0xff]
      %v1059 = vld [vmem:[%s238 + $0xb2] sm:$0xff]
      %v1060 = vld [vmem:[%s238 + $0xc2] sm:$0xff]
      %v1061 = vld [vmem:[%s238 + $0xca] sm:$0xff]
      %v1062 = vld [vmem:[%s238 + $0xda] sm:$0xff]
      %v1063 = vld [vmem:[%s238 + $0xe2] sm:$0xff]
      %v1064 = vld [vmem:[%s238 + $0xf2] sm:$0xff]
      %v1065 = vld [vmem:[%s238 + $0xfa] sm:$0xff]
      %v1066 = vld [vmem:[%s238 + $0x10a] sm:$0xff]
      %v1067 = vld [vmem:[%s238 + $0x112] sm:$0xff]
      %v1068 = vld [vmem:[%s238 + $0x122] sm:$0xff]
      %v1069 = vld [vmem:[%s238 + $0x12a] sm:$0xff]
      %v1070 = vld [vmem:[%s238 + $0x13a] sm:$0xff]
      %v1071 = vld [vmem:[%s238 + $0x142] sm:$0xff]
      %v1072 = vld [vmem:[%s238 + $0x152] sm:$0xff]
      %v1073 = vld [vmem:[%s238 + $0x15a] sm:$0xff]
      %v1074 = vld [vmem:[%s238 + $0x16a] sm:$0xff]
      %v1075 = vld [vmem:[%s238 + $0x172] sm:$0xff]
      %v1076 = vmul.f32 %v1044, 0.23570226
      %v1077 = vmul.f32 %v1045, 0.23570226
      %v1078 = vmul.f32 %v1046, 0.23570226
      %v1079 = vmul.f32 %v1047, 0.23570226
      %v1080 = vmul.f32 %v1048, 0.23570226
      %v1081 = vmul.f32 %v1049, 0.23570226
      %v1082 = vmul.f32 %v1050, 0.23570226
      %v1083 = vmul.f32 %v1051, 0.23570226
      %v1084 = vmul.f32 %v1052, 0.23570226
      %v1085 = vmul.f32 %v1053, 0.23570226
      %v1086 = vmul.f32 %v1054, 0.23570226
      %v1087 = vmul.f32 %v1055, 0.23570226
      %v1088 = vmul.f32 %v1056, 0.23570226
      %v1089 = vmul.f32 %v1057, 0.23570226
      %v1090 = vmul.f32 %v1058, 0.23570226
      %v1091 = vmul.f32 %v1059, 0.23570226
      %v1092 = vmul.f32 %v1060, 0.23570226
      %v1093 = vmul.f32 %v1061, 0.23570226
      %v1094 = vmul.f32 %v1062, 0.23570226
      %v1095 = vmul.f32 %v1063, 0.23570226
      %v1096 = vmul.f32 %v1064, 0.23570226
      %v1097 = vmul.f32 %v1065, 0.23570226
      %v1098 = vmul.f32 %v1066, 0.23570226
      %v1099 = vmul.f32 %v1067, 0.23570226
      %v1100 = vmul.f32 %v1068, 0.23570226
      %v1101 = vmul.f32 %v1069, 0.23570226
      %v1102 = vmul.f32 %v1070, 0.23570226
      %v1103 = vmul.f32 %v1071, 0.23570226
      %v1104 = vmul.f32 %v1072, 0.23570226
      %v1105 = vmul.f32 %v1073, 0.23570226
      %v1106 = vmul.f32 %v1074, 0.23570226
      %v1107 = vmul.f32 %v1075, 0.23570226
      %s1108 = scalar_lea.vmem %s243, 32
      %v1109 = vld [vmem:[%s1108] sm:$0xff]
      %v1110 = vld [vmem:[%s1108 + $0x8] sm:$0xf]
      %v1112 = vsel %vm394, %v1076, 0
      %v1115 = vsel %vm394, %v1077, 0
      %v1118 = vsel %vm394, %v1078, 0
      %v1121 = vsel %vm394, %v1079, 0
      %v1124 = vsel %vm394, %v1080, 0
      %v1127 = vsel %vm394, %v1081, 0
      %v1130 = vsel %vm394, %v1082, 0
      %v1133 = vsel %vm394, %v1083, 0
      %v1136 = vsel %vm394, %v1084, 0
      %v1139 = vsel %vm394, %v1085, 0
      %v1142 = vsel %vm394, %v1086, 0
      %v1145 = vsel %vm394, %v1087, 0
      %v1148 = vsel %vm394, %v1088, 0
      %v1151 = vsel %vm394, %v1089, 0
      %v1154 = vsel %vm394, %v1090, 0
      %v1157 = vsel %vm394, %v1091, 0
      %v1160 = vsel %vm394, %v1092, 0
      %v1163 = vsel %vm394, %v1093, 0
      %v1166 = vsel %vm394, %v1094, 0
      %v1169 = vsel %vm394, %v1095, 0
      %v1172 = vsel %vm394, %v1096, 0
      %v1175 = vsel %vm394, %v1097, 0
      %v1178 = vsel %vm394, %v1098, 0
      %v1181 = vsel %vm394, %v1099, 0
      %v1184 = vsel %vm394, %v1100, 0
      %v1187 = vsel %vm394, %v1101, 0
      %v1190 = vsel %vm394, %v1102, 0
      %v1193 = vsel %vm394, %v1103, 0
      %v1196 = vsel %vm394, %v1104, 0
      %v1199 = vsel %vm394, %v1105, 0
      %v1202 = vsel %vm394, %v1106, 0
      %v1205 = vsel %vm394, %v1107, 0
      %v1208 = vsel %vm491, %v1110, 0
      %1210 = vmatprep.subr.mxu0 0.0
      %1211 = vmatpush1.msra.mxu0 0.0
      %1212 = vmatprep.subr.mxu0 0.0
      %1213 = vmatpush1.msra.mxu0 0.0
      %1214 = vmatprep.subr.mxu0 0.0
      %1215 = vmatpush1.msra.mxu0 0.0
      %1216 = vmatprep.subr.mxu0 0.0
      %1217 = vmatpush1.msra.mxu0 0.0
      %1218 = vmatprep.subr.mxu0 0.0
      %1219 = vmatpush1.msra.mxu0 0.0
      %1220 = vmatprep.subr.mxu0 0.0
      %1221 = vmatpush1.msra.mxu0 0.0
      %1222 = vmatprep.subr.mxu0 0.0
      %1223 = vmatpush1.msra.mxu0 0.0
      %1224 = vmatprep.subr.mxu0 0.0
      %1225 = vmatpush1.msra.mxu0 0.0
      %1226 = vmatprep.subr.mxu0 0.0
      %1227 = vmatpush1.msra.mxu0 0.0
      %1228 = vmatprep.subr.mxu0 0.0
      %1229 = vmatpush1.msra.mxu0 0.0
      %1230 = vmatprep.subr.mxu0 0.0
      %1231 = vmatpush1.msra.mxu0 0.0
      %1232 = vmatprep.subr.mxu0 0.0
      %1233 = vmatpush1.msra.mxu0 0.0
      %1234 = vmatprep.subr.mxu0 0.0
      %1235 = vmatpush1.msra.mxu0 0.0
      %1236 = vmatprep.subr.mxu0 0.0
      %1237 = vmatpush1.msra.mxu0 0.0
      %1238 = vmatprep.subr.mxu0 0.0
      %1239 = vmatpush1.msra.mxu0 %v1208
      %1240 = vmatprep.subr.mxu0 0.0
      %1241 = vmatpush1.msra.mxu0 %v1109
      %1242 = vmatprep.subr.mxu0 0.0
      %1243 = vmatpush2.msra.mxu0 0.0
      %1244 = vmatprep.subr.mxu0 0.0
      %1245 = vmatpush2.msra.mxu0 0.0
      %1246 = vmatprep.subr.mxu0 0.0
      %1247 = vmatpush2.msra.mxu0 0.0
      %1248 = vmatprep.subr.mxu0 0.0
      %1249 = vmatpush2.msra.mxu0 0.0
      %1250 = vmatprep.subr.mxu0 0.0
      %1251 = vmatpush2.msra.mxu0 0.0
      %1252 = vmatprep.subr.mxu0 0.0
      %1253 = vmatpush2.msra.mxu0 0.0
      %1254 = vmatprep.subr.mxu0 0.0
      %1255 = vmatpush2.msra.mxu0 0.0
      %1256 = vmatprep.subr.mxu0 0.0
      %1257 = vmatpush2.msra.mxu0 0.0
      %1258 = vmatprep.subr.mxu0 0.0
      %1259 = vmatpush2.msra.mxu0 0.0
      %1260 = vmatprep.subr.mxu0 0.0
      %1261 = vmatpush2.msra.mxu0 0.0
      %1262 = vmatprep.subr.mxu0 0.0
      %1263 = vmatpush2.msra.mxu0 0.0
      %1264 = vmatprep.subr.mxu0 0.0
      %1265 = vmatpush2.msra.mxu0 0.0
      %1266 = vmatprep.subr.mxu0 0.0
      %1267 = vmatpush2.msra.mxu0 0.0
      %1268 = vmatprep.subr.mxu0 0.0
      %1269 = vmatpush2.msra.mxu0 0.0
      %1270 = vmatprep.subr.mxu0 0.0
      %1271 = vmatpush2.msra.mxu0 0.0
      %1272 = vmatprep.subr.mxu0 0.0
      %1273 = vmatpush2.msra.mxu0 0.0
      %1274 = vmatprep.mubr.f32.mxu0 0.0
      %1275 = vmatmul.mubr.f32.gmra.mxu0 %v1112
      %v1276 = vpop.f32.mrf.mxu0
      %v1277 = vadd.f32 0.0, %v1276
      %v1278 = vpop.f32.mrf.mxu0
      %1279 = vmatprep.mubr.f32.mxu0 0.0
      %1280 = vmatmul.mubr.f32.gmra.mxu0 %v1115
      %v1281 = vpop.f32.mrf.mxu0
      %v1282 = vadd.f32 0.0, %v1281
      %v1283 = vpop.f32.mrf.mxu0
      %1284 = vmatprep.mubr.f32.mxu0 0.0
      %1285 = vmatmul.mubr.f32.gmra.mxu0 %v1118
      %v1286 = vpop.f32.mrf.mxu0
      %v1287 = vadd.f32 0.0, %v1286
      %v1288 = vpop.f32.mrf.mxu0
      %1289 = vmatprep.mubr.f32.mxu0 0.0
      %1290 = vmatmul.mubr.f32.gmra.mxu0 %v1121
      %v1291 = vpop.f32.mrf.mxu0
      %v1292 = vadd.f32 0.0, %v1291
      %v1293 = vpop.f32.mrf.mxu0
      %1294 = vmatprep.mubr.f32.mxu0 0.0
      %1295 = vmatmul.mubr.f32.gmra.mxu0 %v1124
      %v1296 = vpop.f32.mrf.mxu0
      %v1297 = vadd.f32 0.0, %v1296
      %v1298 = vpop.f32.mrf.mxu0
      %1299 = vmatprep.mubr.f32.mxu0 0.0
      %1300 = vmatmul.mubr.f32.gmra.mxu0 %v1127
      %v1301 = vpop.f32.mrf.mxu0
      %v1302 = vadd.f32 0.0, %v1301
      %v1303 = vpop.f32.mrf.mxu0
      %1304 = vmatprep.mubr.f32.mxu0 0.0
      %1305 = vmatmul.mubr.f32.gmra.mxu0 %v1130
      %v1306 = vpop.f32.mrf.mxu0
      %v1307 = vadd.f32 0.0, %v1306
      %v1308 = vpop.f32.mrf.mxu0
      %1309 = vmatprep.mubr.f32.mxu0 0.0
      %1310 = vmatmul.mubr.f32.gmra.mxu0 %v1133
      %v1311 = vpop.f32.mrf.mxu0
      %v1312 = vadd.f32 0.0, %v1311
      %v1313 = vpop.f32.mrf.mxu0
      %1314 = vmatprep.mubr.f32.mxu0 0.0
      %1315 = vmatmul.mubr.f32.gmra.mxu0 %v1136
      %v1316 = vpop.f32.mrf.mxu0
      %v1317 = vadd.f32 0.0, %v1316
      %v1318 = vpop.f32.mrf.mxu0
      %1319 = vmatprep.mubr.f32.mxu0 0.0
      %1320 = vmatmul.mubr.f32.gmra.mxu0 %v1139
      %v1321 = vpop.f32.mrf.mxu0
      %v1322 = vadd.f32 0.0, %v1321
      %v1323 = vpop.f32.mrf.mxu0
      %1324 = vmatprep.mubr.f32.mxu0 0.0
      %1325 = vmatmul.mubr.f32.gmra.mxu0 %v1142
      %v1326 = vpop.f32.mrf.mxu0
      %v1327 = vadd.f32 0.0, %v1326
      %v1328 = vpop.f32.mrf.mxu0
      %1329 = vmatprep.mubr.f32.mxu0 0.0
      %1330 = vmatmul.mubr.f32.gmra.mxu0 %v1145
      %v1331 = vpop.f32.mrf.mxu0
      %v1332 = vadd.f32 0.0, %v1331
      %v1333 = vpop.f32.mrf.mxu0
      %1334 = vmatprep.mubr.f32.mxu0 0.0
      %1335 = vmatmul.mubr.f32.gmra.mxu0 %v1148
      %v1336 = vpop.f32.mrf.mxu0
      %v1337 = vadd.f32 0.0, %v1336
      %v1338 = vpop.f32.mrf.mxu0
      %1339 = vmatprep.mubr.f32.mxu0 0.0
      %1340 = vmatmul.mubr.f32.gmra.mxu0 %v1151
      %v1341 = vpop.f32.mrf.mxu0
      %v1342 = vadd.f32 0.0, %v1341
      %v1343 = vpop.f32.mrf.mxu0
      %1344 = vmatprep.mubr.f32.mxu0 0.0
      %1345 = vmatmul.mubr.f32.gmra.mxu0 %v1154
      %v1346 = vpop.f32.mrf.mxu0
      %v1347 = vadd.f32 0.0, %v1346
      %v1348 = vpop.f32.mrf.mxu0
      %1349 = vmatprep.mubr.f32.mxu0 0.0
      %1350 = vmatmul.mubr.f32.gmra.mxu0 %v1157
      %v1351 = vpop.f32.mrf.mxu0
      %v1352 = vadd.f32 0.0, %v1351
      %v1353 = vpop.f32.mrf.mxu0
      %1354 = vmatprep.mubr.f32.mxu0 0.0
      %1355 = vmatmul.mubr.f32.gmra.mxu0 %v1160
      %v1356 = vpop.f32.mrf.mxu0
      %v1357 = vadd.f32 0.0, %v1356
      %v1358 = vpop.f32.mrf.mxu0
      %1359 = vmatprep.mubr.f32.mxu0 0.0
      %1360 = vmatmul.mubr.f32.gmra.mxu0 %v1163
      %v1361 = vpop.f32.mrf.mxu0
      %v1362 = vadd.f32 0.0, %v1361
      %v1363 = vpop.f32.mrf.mxu0
      %1364 = vmatprep.mubr.f32.mxu0 0.0
      %1365 = vmatmul.mubr.f32.gmra.mxu0 %v1166
      %v1366 = vpop.f32.mrf.mxu0
      %v1367 = vadd.f32 0.0, %v1366
      %v1368 = vpop.f32.mrf.mxu0
      %1369 = vmatprep.mubr.f32.mxu0 0.0
      %1370 = vmatmul.mubr.f32.gmra.mxu0 %v1169
      %v1371 = vpop.f32.mrf.mxu0
      %v1372 = vadd.f32 0.0, %v1371
      %v1373 = vpop.f32.mrf.mxu0
      %1374 = vmatprep.mubr.f32.mxu0 0.0
      %1375 = vmatmul.mubr.f32.gmra.mxu0 %v1172
      %v1376 = vpop.f32.mrf.mxu0
      %v1377 = vadd.f32 0.0, %v1376
      %v1378 = vpop.f32.mrf.mxu0
      %1379 = vmatprep.mubr.f32.mxu0 0.0
      %1380 = vmatmul.mubr.f32.gmra.mxu0 %v1175
      %v1381 = vpop.f32.mrf.mxu0
      %v1382 = vadd.f32 0.0, %v1381
      %v1383 = vpop.f32.mrf.mxu0
      %1384 = vmatprep.mubr.f32.mxu0 0.0
      %1385 = vmatmul.mubr.f32.gmra.mxu0 %v1178
      %v1386 = vpop.f32.mrf.mxu0
      %v1387 = vadd.f32 0.0, %v1386
      %v1388 = vpop.f32.mrf.mxu0
      %1389 = vmatprep.mubr.f32.mxu0 0.0
      %1390 = vmatmul.mubr.f32.gmra.mxu0 %v1181
      %v1391 = vpop.f32.mrf.mxu0
      %v1392 = vadd.f32 0.0, %v1391
      %v1393 = vpop.f32.mrf.mxu0
      %1394 = vmatprep.mubr.f32.mxu0 0.0
      %1395 = vmatmul.mubr.f32.gmra.mxu0 %v1184
      %v1396 = vpop.f32.mrf.mxu0
      %v1397 = vadd.f32 0.0, %v1396
      %v1398 = vpop.f32.mrf.mxu0
      %1399 = vmatprep.mubr.f32.mxu0 0.0
      %1400 = vmatmul.mubr.f32.gmra.mxu0 %v1187
      %v1401 = vpop.f32.mrf.mxu0
      %v1402 = vadd.f32 0.0, %v1401
      %v1403 = vpop.f32.mrf.mxu0
      %1404 = vmatprep.mubr.f32.mxu0 0.0
      %1405 = vmatmul.mubr.f32.gmra.mxu0 %v1190
      %v1406 = vpop.f32.mrf.mxu0
      %v1407 = vadd.f32 0.0, %v1406
      %v1408 = vpop.f32.mrf.mxu0
      %1409 = vmatprep.mubr.f32.mxu0 0.0
      %1410 = vmatmul.mubr.f32.gmra.mxu0 %v1193
      %v1411 = vpop.f32.mrf.mxu0
      %v1412 = vadd.f32 0.0, %v1411
      %v1413 = vpop.f32.mrf.mxu0
      %1414 = vmatprep.mubr.f32.mxu0 0.0
      %1415 = vmatmul.mubr.f32.gmra.mxu0 %v1196
      %v1416 = vpop.f32.mrf.mxu0
      %v1417 = vadd.f32 0.0, %v1416
      %v1418 = vpop.f32.mrf.mxu0
      %1419 = vmatprep.mubr.f32.mxu0 0.0
      %1420 = vmatmul.mubr.f32.gmra.mxu0 %v1199
      %v1421 = vpop.f32.mrf.mxu0
      %v1422 = vadd.f32 0.0, %v1421
      %v1423 = vpop.f32.mrf.mxu0
      %1424 = vmatprep.mubr.f32.mxu0 0.0
      %1425 = vmatmul.mubr.f32.gmra.mxu0 %v1202
      %v1426 = vpop.f32.mrf.mxu0
      %v1427 = vadd.f32 0.0, %v1426
      %v1428 = vpop.f32.mrf.mxu0
      %1429 = vmatprep.mubr.f32.mxu0 0.0
      %1430 = vmatmul.mubr.f32.gmra.mxu0 %v1205
      %v1431 = vpop.f32.mrf.mxu0
      %v1432 = vadd.f32 0.0, %v1431
      %v1433 = vpop.f32.mrf.mxu0
      %1434 = vdwg.mxu0
      %v1435 = vadd.f32 %v886, %v1277
      %v1436 = vadd.f32 %v891, %v1282
      %v1437 = vadd.f32 %v896, %v1287
      %v1438 = vadd.f32 %v901, %v1292
      %v1439 = vadd.f32 %v906, %v1297
      %v1440 = vadd.f32 %v911, %v1302
      %v1441 = vadd.f32 %v916, %v1307
      %v1442 = vadd.f32 %v921, %v1312
      %v1443 = vadd.f32 %v926, %v1317
      %v1444 = vadd.f32 %v931, %v1322
      %v1445 = vadd.f32 %v936, %v1327
      %v1446 = vadd.f32 %v941, %v1332
      %v1447 = vadd.f32 %v946, %v1337
      %v1448 = vadd.f32 %v951, %v1342
      %v1449 = vadd.f32 %v956, %v1347
      %v1450 = vadd.f32 %v961, %v1352
      %v1451 = vadd.f32 %v966, %v1357
      %v1452 = vadd.f32 %v971, %v1362
      %v1453 = vadd.f32 %v976, %v1367
      %v1454 = vadd.f32 %v981, %v1372
      %v1455 = vadd.f32 %v986, %v1377
      %v1456 = vadd.f32 %v991, %v1382
      %v1457 = vadd.f32 %v996, %v1387
      %v1458 = vadd.f32 %v1001, %v1392
      %v1459 = vadd.f32 %v1006, %v1397
      %v1460 = vadd.f32 %v1011, %v1402
      %v1461 = vadd.f32 %v1016, %v1407
      %v1462 = vadd.f32 %v1021, %v1412
      %v1463 = vadd.f32 %v1026, %v1417
      %v1464 = vadd.f32 %v1031, %v1422
      %v1465 = vadd.f32 %v1036, %v1427
      %v1466 = vadd.f32 %v1041, %v1432
      %v1467 = vld [vmem:[%s246] sm:$0x1]
      %v1469 = vlaneseq
      %v1470 = vshrl.u32 %v1469, 7
      %v1471 = vsub.s32 0, %v1470
      %v1472 = vrot.slane %v1467, %v1471
      %v1474 = vadd.f32 %v1435, %v1472
      %v1475 = vadd.f32 %v1436, %v1472
      %v1476 = vadd.f32 %v1437, %v1472
      %v1477 = vadd.f32 %v1438, %v1472
      %v1478 = vadd.f32 %v1439, %v1472
      %v1479 = vadd.f32 %v1440, %v1472
      %v1480 = vadd.f32 %v1441, %v1472
      %v1481 = vadd.f32 %v1442, %v1472
      %v1482 = vadd.f32 %v1443, %v1472
      %v1483 = vadd.f32 %v1444, %v1472
      %v1484 = vadd.f32 %v1445, %v1472
      %v1485 = vadd.f32 %v1446, %v1472
      %v1486 = vadd.f32 %v1447, %v1472
      %v1487 = vadd.f32 %v1448, %v1472
      %v1488 = vadd.f32 %v1449, %v1472
      %v1489 = vadd.f32 %v1450, %v1472
      %v1490 = vadd.f32 %v1451, %v1472
      %v1491 = vadd.f32 %v1452, %v1472
      %v1492 = vadd.f32 %v1453, %v1472
      %v1493 = vadd.f32 %v1454, %v1472
      %v1494 = vadd.f32 %v1455, %v1472
      %v1495 = vadd.f32 %v1456, %v1472
      %v1496 = vadd.f32 %v1457, %v1472
      %v1497 = vadd.f32 %v1458, %v1472
      %v1498 = vadd.f32 %v1459, %v1472
      %v1499 = vadd.f32 %v1460, %v1472
      %v1500 = vadd.f32 %v1461, %v1472
      %v1501 = vadd.f32 %v1462, %v1472
      %v1502 = vadd.f32 %v1463, %v1472
      %v1503 = vadd.f32 %v1464, %v1472
      %v1504 = vadd.f32 %v1465, %v1472
      %v1505 = vadd.f32 %v1466, %v1472
      %vm1506 = vcmp.ge.f32.partialorder %v1474, 0.0
      %vm1507 = vcmp.ge.f32.partialorder %v1475, 0.0
      %vm1508 = vcmp.ge.f32.partialorder %v1476, 0.0
      %vm1509 = vcmp.ge.f32.partialorder %v1477, 0.0
      %vm1510 = vcmp.ge.f32.partialorder %v1478, 0.0
      %vm1511 = vcmp.ge.f32.partialorder %v1479, 0.0
      %vm1512 = vcmp.ge.f32.partialorder %v1480, 0.0
      %vm1513 = vcmp.ge.f32.partialorder %v1481, 0.0
      %vm1514 = vcmp.ge.f32.partialorder %v1482, 0.0
      %vm1515 = vcmp.ge.f32.partialorder %v1483, 0.0
      %vm1516 = vcmp.ge.f32.partialorder %v1484, 0.0
      %vm1517 = vcmp.ge.f32.partialorder %v1485, 0.0
      %vm1518 = vcmp.ge.f32.partialorder %v1486, 0.0
      %vm1519 = vcmp.ge.f32.partialorder %v1487, 0.0
      %vm1520 = vcmp.ge.f32.partialorder %v1488, 0.0
      %vm1521 = vcmp.ge.f32.partialorder %v1489, 0.0
      %vm1522 = vcmp.ge.f32.partialorder %v1490, 0.0
      %vm1523 = vcmp.ge.f32.partialorder %v1491, 0.0
      %vm1524 = vcmp.ge.f32.partialorder %v1492, 0.0
      %vm1525 = vcmp.ge.f32.partialorder %v1493, 0.0
      %vm1526 = vcmp.ge.f32.partialorder %v1494, 0.0
      %vm1527 = vcmp.ge.f32.partialorder %v1495, 0.0
      %vm1528 = vcmp.ge.f32.partialorder %v1496, 0.0
      %vm1529 = vcmp.ge.f32.partialorder %v1497, 0.0
      %vm1530 = vcmp.ge.f32.partialorder %v1498, 0.0
      %vm1531 = vcmp.ge.f32.partialorder %v1499, 0.0
      %vm1532 = vcmp.ge.f32.partialorder %v1500, 0.0
      %vm1533 = vcmp.ge.f32.partialorder %v1501, 0.0
      %vm1534 = vcmp.ge.f32.partialorder %v1502, 0.0
      %vm1535 = vcmp.ge.f32.partialorder %v1503, 0.0
      %vm1536 = vcmp.ge.f32.partialorder %v1504, 0.0
      %vm1537 = vcmp.ge.f32.partialorder %v1505, 0.0
      %v1538 = vmul.f32 %v1474, 0.2
      %v1539 = vmul.f32 %v1475, 0.2
      %v1540 = vmul.f32 %v1476, 0.2
      %v1541 = vmul.f32 %v1477, 0.2
      %v1542 = vmul.f32 %v1478, 0.2
      %v1543 = vmul.f32 %v1479, 0.2
      %v1544 = vmul.f32 %v1480, 0.2
      %v1545 = vmul.f32 %v1481, 0.2
      %v1546 = vmul.f32 %v1482, 0.2
      %v1547 = vmul.f32 %v1483, 0.2
      %v1548 = vmul.f32 %v1484, 0.2
      %v1549 = vmul.f32 %v1485, 0.2
      %v1550 = vmul.f32 %v1486, 0.2
      %v1551 = vmul.f32 %v1487, 0.2
      %v1552 = vmul.f32 %v1488, 0.2
      %v1553 = vmul.f32 %v1489, 0.2
      %v1554 = vmul.f32 %v1490, 0.2
      %v1555 = vmul.f32 %v1491, 0.2
      %v1556 = vmul.f32 %v1492, 0.2
      %v1557 = vmul.f32 %v1493, 0.2
      %v1558 = vmul.f32 %v1494, 0.2
      %v1559 = vmul.f32 %v1495, 0.2
      %v1560 = vmul.f32 %v1496, 0.2
      %v1561 = vmul.f32 %v1497, 0.2
      %v1562 = vmul.f32 %v1498, 0.2
      %v1563 = vmul.f32 %v1499, 0.2
      %v1564 = vmul.f32 %v1500, 0.2
      %v1565 = vmul.f32 %v1501, 0.2
      %v1566 = vmul.f32 %v1502, 0.2
      %v1567 = vmul.f32 %v1503, 0.2
      %v1568 = vmul.f32 %v1504, 0.2
      %v1569 = vmul.f32 %v1505, 0.2
      %v1570 = vsel %vm1506, %v1474, %v1538
      %v1571 = vsel %vm1507, %v1475, %v1539
      %v1572 = vsel %vm1508, %v1476, %v1540
      %v1573 = vsel %vm1509, %v1477, %v1541
      %v1574 = vsel %vm1510, %v1478, %v1542
      %v1575 = vsel %vm1511, %v1479, %v1543
      %v1576 = vsel %vm1512, %v1480, %v1544
      %v1577 = vsel %vm1513, %v1481, %v1545
      %v1578 = vsel %vm1514, %v1482, %v1546
      %v1579 = vsel %vm1515, %v1483, %v1547
      %v1580 = vsel %vm1516, %v1484, %v1548
      %v1581 = vsel %vm1517, %v1485, %v1549
      %v1582 = vsel %vm1518, %v1486, %v1550
      %v1583 = vsel %vm1519, %v1487, %v1551
      %v1584 = vsel %vm1520, %v1488, %v1552
      %v1585 = vsel %vm1521, %v1489, %v1553
      %v1586 = vsel %vm1522, %v1490, %v1554
      %v1587 = vsel %vm1523, %v1491, %v1555
      %v1588 = vsel %vm1524, %v1492, %v1556
      %v1589 = vsel %vm1525, %v1493, %v1557
      %v1590 = vsel %vm1526, %v1494, %v1558
      %v1591 = vsel %vm1527, %v1495, %v1559
      %v1592 = vsel %vm1528, %v1496, %v1560
      %v1593 = vsel %vm1529, %v1497, %v1561
      %v1594 = vsel %vm1530, %v1498, %v1562
      %v1595 = vsel %vm1531, %v1499, %v1563
      %v1596 = vsel %vm1532, %v1500, %v1564
      %v1597 = vsel %vm1533, %v1501, %v1565
      %v1598 = vsel %vm1534, %v1502, %v1566
      %v1599 = vsel %vm1535, %v1503, %v1567
      %v1600 = vsel %vm1536, %v1504, %v1568
      %v1601 = vsel %vm1537, %v1505, %v1569
      %vm1602 = vcmask 64512
      %1603 = vst.msk [vmem:[%s259] sm:$0xff] %vm1602, %v1570
      %1604 = vst.msk [vmem:[%s259 + $0x8] sm:$0xff] %vm1602, %v1571
      %1605 = vst.msk [vmem:[%s259 + $0x10] sm:$0xff] %vm1602, %v1572
      %1606 = vst.msk [vmem:[%s259 + $0x18] sm:$0xff] %vm1602, %v1573
      %1607 = vst.msk [vmem:[%s259 + $0x20] sm:$0xff] %vm1602, %v1574
      %1608 = vst.msk [vmem:[%s259 + $0x28] sm:$0xff] %vm1602, %v1575
      %1609 = vst.msk [vmem:[%s259 + $0x30] sm:$0xff] %vm1602, %v1576
      %1610 = vst.msk [vmem:[%s259 + $0x38] sm:$0xff] %vm1602, %v1577
      %1611 = vst.msk [vmem:[%s259 + $0x40] sm:$0xff] %vm1602, %v1578
      %1612 = vst.msk [vmem:[%s259 + $0x48] sm:$0xff] %vm1602, %v1579
      %1613 = vst.msk [vmem:[%s259 + $0x50] sm:$0xff] %vm1602, %v1580
      %1614 = vst.msk [vmem:[%s259 + $0x58] sm:$0xff] %vm1602, %v1581
      %1615 = vst.msk [vmem:[%s259 + $0x60] sm:$0xff] %vm1602, %v1582
      %1616 = vst.msk [vmem:[%s259 + $0x68] sm:$0xff] %vm1602, %v1583
      %1617 = vst.msk [vmem:[%s259 + $0x70] sm:$0xff] %vm1602, %v1584
      %1618 = vst.msk [vmem:[%s259 + $0x78] sm:$0xff] %vm1602, %v1585
      %1619 = vst.msk [vmem:[%s259 + $0x80] sm:$0xff] %vm1602, %v1586
      %1620 = vst.msk [vmem:[%s259 + $0x88] sm:$0xff] %vm1602, %v1587
      %1621 = vst.msk [vmem:[%s259 + $0x90] sm:$0xff] %vm1602, %v1588
      %1622 = vst.msk [vmem:[%s259 + $0x98] sm:$0xff] %vm1602, %v1589
      %1623 = vst.msk [vmem:[%s259 + $0xa0] sm:$0xff] %vm1602, %v1590
      %1624 = vst.msk [vmem:[%s259 + $0xa8] sm:$0xff] %vm1602, %v1591
      %1625 = vst.msk [vmem:[%s259 + $0xb0] sm:$0xff] %vm1602, %v1592
      %1626 = vst.msk [vmem:[%s259 + $0xb8] sm:$0xff] %vm1602, %v1593
      %1627 = vst.msk [vmem:[%s259 + $0xc0] sm:$0xff] %vm1602, %v1594
      %1628 = vst.msk [vmem:[%s259 + $0xc8] sm:$0xff] %vm1602, %v1595
      %1629 = vst.msk [vmem:[%s259 + $0xd0] sm:$0xff] %vm1602, %v1596
      %1630 = vst.msk [vmem:[%s259 + $0xd8] sm:$0xff] %vm1602, %v1597
      %1631 = vst.msk [vmem:[%s259 + $0xe0] sm:$0xff] %vm1602, %v1598
      %1632 = vst.msk [vmem:[%s259 + $0xe8] sm:$0xff] %vm1602, %v1599
      %1633 = vst.msk [vmem:[%s259 + $0xf0] sm:$0xff] %vm1602, %v1600
      %1634 = vst.msk [vmem:[%s259 + $0xf8] sm:$0xff] %vm1602, %v1601
      %s1635 = smul.u32 16, %s20
      %p1636 = scmp.lt.s32.totalorder %s19, 1
      %s1637 = scalar_select %p1636, %s19, 1
      %p1638 = scmp.lt.s32.totalorder %s1635, 15
      %s1639 = scalar_select %p1638, %s1635, 15
      %p1640 = scmp.lt.s32.totalorder %s21, 0
      %s1641 = scalar_select %p1640, %s21, 0
      %s1642 = smul.addr %s1639, 2
      %s1643 = sadd.s32 %s1641, %s1642
      %s1644 = smul.addr %s1637, 32
      %s1645 = sadd.s32 %s1643, %s1644
      %s1646 = smul.addr %s1645, 8
      %s1647 = scalar_lea.vmem %s3, %s1646
      // Predicated region
      $region33: #{tpu_custom_call.1} parent=31 // pred_check
        %p1648 = pneg %p135
      $region34: #{tpu_custom_call.1} parent=31 // pred_check_branch
        %1650 = sbr.rel (%p1648) target = $region36
      $region35: #{tpu_custom_call.1} parent=31 // pred_region
        %s1651 = smul.u32 16, %s20
      $region36: #{tpu_custom_call.1} parent=31 // pred_fallthru
        _
    $region32: #{tpu_custom_call.1} parent=5 // pred_fallthru
      _
    %p1652 = scmp.le.s32.totalorder 2, %s9
    // Predicated region
    $region37: #{tpu_custom_call.1} parent=5 // pred_check
      %p1653 = pneg %p1652
    $region38: #{tpu_custom_call.1} parent=5 // pred_check_branch
      %1655 = sbr.rel (%p1653) target = $region40
    $region39: #{tpu_custom_call.1} parent=5 // pred_region
      %s1656 = ssub.s32 %s9, 2
      // Predicated region
      $region41: #{tpu_custom_call.1} parent=39 // pred_check
        %p1657 = pneg %p141
      $region42: #{tpu_custom_call.1} parent=39 // pred_check_branch
        %1659 = sbr.rel (%p1657) target = $region44
      $region43: #{tpu_custom_call.1} parent=39 // pred_region
        %s1660 = smul.u32 16, %s23
        %p1661 = scmp.lt.s32.totalorder %s22, 1
        %s1662 = scalar_select %p1661, %s22, 1
        %p1663 = scmp.lt.s32.totalorder %s1660, 15
        %s1664 = scalar_select %p1663, %s1660, 15
        %p1665 = scmp.lt.s32.totalorder %s24, 0
        %s1666 = scalar_select %p1665, %s24, 0
        %s1667 = smul.addr %s1664, 2
        %s1668 = sadd.s32 %s1666, %s1667
        %s1669 = smul.addr %s1662, 32
        %s1670 = sadd.s32 %s1668, %s1669
        %s1671 = smul.addr %s1670, 8
        %s1672 = scalar_lea.vmem %s3, %s1671
      $region44: #{tpu_custom_call.1} parent=39 // pred_fallthru
        _
    $region40: #{tpu_custom_call.1} parent=5 // pred_fallthru
      _
  $region6: #{tpu_custom_call.1} parent=0 // loop_footer
    %s13 = sadd.s32 1, %s9
  $region7: #{tpu_custom_call.1} parent=0 // loop_footer_branch
    %8 = sbr.rel target = $region3
  $region8: #{tpu_custom_call.1} parent=0 // loop_exit
    _

</llo_original>
